<compile_context>
chip_gen: v5e
topology: v5e:2x2
jax: 0.10.0
libtpu: 0.0.40
codegen_flags: <defaults>
</compile_context>

<pallas_src>
import functools

import jax
import jax.numpy as jnp
from jax.experimental import pallas as pl
from jax.experimental.pallas import tpu as pltpu

# ---- small synthetic stand-ins for CFG (real model: MODEL_DIM=576, FC_OUT=2048) ----
B = 8            # batch
MODEL_DIM = 128  # CFG.model_dim / encoder feature dim
NUM_HEADS = 4    # CFG.num_heads (head split is a no-op here: seq_len==1 => softmax==1)
FC_OUT = 256     # Model.fc output dim == CFG.image_embedding_dim
PROJ_DIM = 128   # CFG.projection_dim
TEMPERATURE = 1.0
EPS = 1e-5       # torch LayerNorm default eps
_INV_SQRT2 = 0.7071067811865476

# ---- packed bias / LayerNorm-vector slab layout (one f32 [16, 256] input) ----
_VEC_SLAB_WIDTH = max(MODEL_DIM, FC_OUT, PROJ_DIM)   # 256 (multiple of 128)
_VEC_SLAB_ROWS = 16                                   # 14 used, padded to a multiple of 8
(ROW_CA_BV, ROW_CA_BO, ROW_CA_LNG, ROW_CA_LNB, ROW_CA_BFC,
 ROW_FC_B,
 ROW_PC_BP, ROW_PC_BFC, ROW_PC_LNG, ROW_PC_LNB,
 ROW_PL_BP, ROW_PL_BFC, ROW_PL_LNG, ROW_PL_LNB) = range(14)


# ---------------- shared math helpers (pure jnp; usable inside and outside kernels) ----
def _gelu_exact(x):
    return 0.5 * x * (1.0 + jax.lax.erf(x * _INV_SQRT2))


def _layernorm(x, gamma, beta, inv_n):
    # two-pass (mean, then centered sum-of-squares): no catastrophic cancellation.
    mean = jnp.sum(x, axis=-1, keepdims=True) * inv_n
    xc = x - mean
    var = jnp.sum(xc * xc, axis=-1, keepdims=True) * inv_n
    return xc * jax.lax.rsqrt(var + EPS) * gamma + beta


def _linear(x, w, b):
    # cast activations to the weight dtype only at the matmul boundary (bf16 weights);
    # accumulation stays f32 via preferred_element_type; bias add stays f32.
    return jnp.dot(x.astype(w.dtype), w, preferred_element_type=jnp.float32) + b


def _matmul_nt(a, b):
    # a @ b.T without materializing a transpose: contract the last dim of both operands.
    return jax.lax.dot_general(a, b, (((1,), (1,)), ((), ())),
                               preferred_element_type=jnp.float32)


# ------------------------------------ fused kernel -----------------------------------
def dsi4pr_fused_kernel(
        cam_ref, lid_ref, vec_ref,
        wv_ref, wo_ref, ca_wfc_ref,
        fcw_hbm, pc_wp_hbm, pc_wfc_ref, pl_wp_hbm, pl_wfc_ref,
        loss_ref,
        fcw_buf, pc_wp_buf, pl_wp_buf, dma_sem,
        *, temperature, inv_e, inv_p):
    # Kick off the big late-stage weight DMAs immediately; they overlap with the
    # cross-attention compute below and are waited on only where first consumed.
    cp_fc = pltpu.make_async_copy(fcw_hbm, fcw_buf, dma_sem.at[0])
    cp_pc = pltpu.make_async_copy(pc_wp_hbm, pc_wp_buf, dma_sem.at[1])
    cp_pl = pltpu.make_async_copy(pl_wp_hbm, pl_wp_buf, dma_sem.at[2])
    cp_fc.start()
    cp_pc.start()
    cp_pl.start()

    nb = cam_ref.shape[0]
    E = wv_ref.shape[0]
    F = fcw_buf.shape[1]
    P = pc_wp_buf.shape[1]

    slab = vec_ref[...]                       # packed biases / LN params, one load

    # Cross-attention params are used twice: broadcast once (JAX won't CSE broadcasts).
    ca_bv = jnp.broadcast_to(slab[ROW_CA_BV:ROW_CA_BV + 1, :E], (nb, E))
    ca_bo = jnp.broadcast_to(slab[ROW_CA_BO:ROW_CA_BO + 1, :E], (nb, E))
    ca_g = jnp.broadcast_to(slab[ROW_CA_LNG:ROW_CA_LNG + 1, :E], (nb, E))
    ca_b = jnp.broadcast_to(slab[ROW_CA_LNB:ROW_CA_LNB + 1, :E], (nb, E))
    ca_bfc = jnp.broadcast_to(slab[ROW_CA_BFC:ROW_CA_BFC + 1, :E], (nb, E))
    fc_b = slab[ROW_FC_B:ROW_FC_B + 1, :F]

    wv, wo, ca_wfc = wv_ref[...], wo_ref[...], ca_wfc_ref[...]

    def cross_attn(q, v):
        # seq_len == 1 after unsqueeze(0): softmax over a single key is exactly 1, so
        # attn_output == out_proj(v_proj(value)); q/k projections cancel exactly.
        vp = _linear(v, wv, ca_bv)
        attn = _linear(vp, wo, ca_bo)
        x = _layernorm(q + attn, ca_g, ca_b, inv_e)
        return _linear(_gelu_exact(x), ca_wfc, ca_bfc)          # dropout: identity (eval)

    cam = cam_ref[...]
    lid = lid_ref[...]
    cam2 = cross_attn(cam, lid)        # uses original lidar features
    lid2 = cross_attn(lid, cam2)       # uses UPDATED camera features (matches torch forward)

    # Shared Model.fc + ReLU: weight value loaded once, reused for both M=B matmuls
    # (no concatenate / slice VMEM copies).
    cp_fc.wait()
    fcw = fcw_buf[...]
    h_cam = jnp.maximum(_linear(cam2, fcw, fc_b), 0.0)
    h_lid = jnp.maximum(_linear(lid2, fcw, fc_b), 0.0)

    cp_pc.wait()
    cp_pl.wait()

    def projection(h, wp, wfc, r_bp, r_bfc, r_g, r_b):
        bp = slab[r_bp:r_bp + 1, :P]
        bfc = slab[r_bfc:r_bfc + 1, :P]
        g = slab[r_g:r_g + 1, :P]
        b = slab[r_b:r_b + 1, :P]
        projected = _linear(h, wp, bp)
        y = _linear(_gelu_exact(projected), wfc, bfc) + projected   # dropout: identity
        return _layernorm(y, g, b, inv_p)

    cam_emb = projection(h_cam, pc_wp_buf[...], pc_wfc_ref[...],
                         ROW_PC_BP, ROW_PC_BFC, ROW_PC_LNG, ROW_PC_LNB)
    lid_emb = projection(h_lid, pl_wp_buf[...], pl_wfc_ref[...],
                         ROW_PL_BP, ROW_PL_BFC, ROW_PL_LNG, ROW_PL_LNB)

    # ------------- CLIP-style loss: no explicit transposes anywhere -------------------
    logits = _matmul_nt(lid_emb, cam_emb) * (1.0 / temperature)     # lid @ cam.T
    cam_sim = _matmul_nt(cam_emb, cam_emb)
    lid_sim = _matmul_nt(lid_emb, lid_emb)

    t = (cam_sim + lid_sim) * (0.5 * temperature)
    t = t - jnp.max(t, axis=-1, keepdims=True)
    e = jnp.exp(t)
    targets = e / jnp.sum(e, axis=-1, keepdims=True)   # exact divide: these are the labels

    # log_softmax over rows (lidar loss) and over columns (camera loss == transposed CE).
    lr = logits - jnp.max(logits, axis=-1, keepdims=True)
    ls_row = lr - jnp.log(jnp.sum(jnp.exp(lr), axis=-1, keepdims=True))
    lc = logits - jnp.max(logits, axis=0, keepdims=True)
    ls_col = lc - jnp.log(jnp.sum(jnp.exp(lc), axis=0, keepdims=True))

    lidar_total = jnp.sum(-targets * ls_row)    # == sum_i cross_entropy(logits,   targets  )[i]
    camera_total = jnp.sum(-targets * ls_col)   # == sum_i cross_entropy(logits.T, targets.T)[i]
    loss = (lidar_total + camera_total) * (0.5 / nb)   # == mean((camera_loss + lidar_loss)/2)
    loss_ref[0, 0] = loss                       # scalar result -> SMEM


# ------------------------------- param packing ----------------------------------------
def _pack_param_vectors(params):
    """Pack all (dim,) biases / LayerNorm vectors into one f32 [16, 256] slab."""
    ca = params["ca"]
    pc = params["proj_camera"]
    plr = params["proj_lidar"]
    order = [ca["bv"], ca["bo"], ca["ln_g"], ca["ln_b"], ca["bfc"],
             params["fc_b"],
             pc["bp"], pc["bfc"], pc["ln_g"], pc["ln_b"],
             plr["bp"], plr["bfc"], plr["ln_g"], plr["ln_b"]]
    rows = [jnp.pad(v.astype(jnp.float32), (0, _VEC_SLAB_WIDTH - v.shape[0])) for v in order]
    slab = jnp.stack(rows)
    return jnp.pad(slab, ((0, _VEC_SLAB_ROWS - slab.shape[0]), (0, 0)))


# ------------------------------- pallas_call wrapper ----------------------------------
def model_forward(cam_feat, lid_feat, params):
    ca = params["ca"]
    pc = params["proj_camera"]
    plr = params["proj_lidar"]
    vec_slab = _pack_param_vectors(params)

    args = (cam_feat, lid_feat, vec_slab,
            ca["wv"], ca["wo"], ca["wfc"],
            params["fc_w"], pc["wp"], pc["wfc"], plr["wp"], plr["wfc"])

    w_dtype = params["fc_w"].dtype
    E, F = params["fc_w"].shape
    P = pc["wp"].shape[1]

    # Scoped-VMEM sizing from the actual footprint: covers v5e's 16 MiB default at real
    # dims, never below the v6e/v7x 32 MiB default, capped under v7x's 64 MiB physical.
    input_bytes = sum(int(x.size) * x.dtype.itemsize for x in args)
    scratch_bytes = (E * F + 2 * F * P) * jnp.dtype(w_dtype).itemsize
    vmem_limit = int(min(max(4 * (input_bytes + scratch_bytes) + (8 << 20), 32 << 20),
                         56 << 20))

    vmem = pltpu.MemorySpace.VMEM
    in_specs = [
        pl.BlockSpec(memory_space=vmem),   # cam_feat
        pl.BlockSpec(memory_space=vmem),   # lid_feat
        pl.BlockSpec(memory_space=vmem),   # packed bias/LN slab
        pl.BlockSpec(memory_space=vmem),   # ca.wv
        pl.BlockSpec(memory_space=vmem),   # ca.wo
        pl.BlockSpec(memory_space=vmem),   # ca.wfc
        pl.BlockSpec(memory_space=pl.ANY),  # fc_w      (manual DMA, overlapped)
        pl.BlockSpec(memory_space=pl.ANY),  # proj_camera.wp (manual DMA, overlapped)
        pl.BlockSpec(memory_space=vmem),   # proj_camera.wfc
        pl.BlockSpec(memory_space=pl.ANY),  # proj_lidar.wp  (manual DMA, overlapped)
        pl.BlockSpec(memory_space=vmem),   # proj_lidar.wfc
    ]

    kernel = functools.partial(dsi4pr_fused_kernel, temperature=TEMPERATURE,
                               inv_e=1.0 / MODEL_DIM, inv_p=1.0 / PROJ_DIM)

    loss = pl.pallas_call(
        kernel,
        out_shape=jax.ShapeDtypeStruct((1, 1), jnp.float32),
        in_specs=in_specs,
        out_specs=pl.BlockSpec(memory_space=pltpu.MemorySpace.SMEM),
        scratch_shapes=[pltpu.VMEM((E, F), w_dtype),
                        pltpu.VMEM((F, P), w_dtype),
                        pltpu.VMEM((F, P), w_dtype),
                        pltpu.SemaphoreType.DMA((3,))],
        compiler_params=pltpu.CompilerParams(vmem_limit_bytes=vmem_limit),
    )(*args)
    return loss[0, 0]


# --------------------------------- pure-JAX reference ---------------------------------
def reference_forward(cam_feat, lid_feat, params):
    # Same dtype policy as the kernel (bf16 weights, bf16 cast at matmul boundary,
    # f32 accumulation) so the comparison isolates kernel correctness.
    ca = params["ca"]

    def ln(x, g, b):
        m = jnp.mean(x, axis=-1, keepdims=True)
        v = jnp.mean((x - m) ** 2, axis=-1, keepdims=True)
        return (x - m) * jax.lax.rsqrt(v + EPS) * g + b

    def cross_attn(q, v):
        attn = _linear(_linear(v, ca["wv"], ca["bv"]), ca["wo"], ca["bo"])
        x = ln(q + attn, ca["ln_g"], ca["ln_b"])
        return _linear(_gelu_exact(x), ca["wfc"], ca["bfc"])

    def fc_relu_proj(x, p):
        h = jnp.maximum(_linear(x, params["fc_w"], params["fc_b"]), 0.0)
        projected = _linear(h, p["wp"], p["bp"])
        y = _linear(_gelu_exact(projected), p["wfc"], p["bfc"]) + projected
        return ln(y, p["ln_g"], p["ln_b"])

    cam2 = cross_attn(cam_feat, lid_feat)
    lid2 = cross_attn(lid_feat, cam2)
    cam_emb = fc_relu_proj(cam2, params["proj_camera"])
    lid_emb = fc_relu_proj(lid2, params["proj_lidar"])

    logits = lid_emb @ cam_emb.T / TEMPERATURE
    targets = jax.nn.softmax((cam_emb @ cam_emb.T + lid_emb @ lid_emb.T) / 2 * TEMPERATURE,
                             axis=-1)
    lidar_loss = jnp.sum(-targets * jax.nn.log_softmax(logits, axis=-1), axis=1)
    camera_loss = jnp.sum(-targets.T * jax.nn.log_softmax(logits.T, axis=-1), axis=1)
    return jnp.mean((camera_loss + lidar_loss) / 2.0)


# ------------------------------------ params ------------------------------------------
def init_params(key, w_dtype=jnp.bfloat16):
    # Weight matrices in bf16 (halves weight DMA); biases / LN params stay f32.
    # On v5e/v6e, int8 weight quantization of fc_w / wp would quarter the DMA further
    # (v7x MXU has no int8; fp8 only).
    E, F, P = MODEL_DIM, FC_OUT, PROJ_DIM
    ks = jax.random.split(key, 10)

    def w(k, shape, scale=0.02):
        return (scale * jax.random.normal(k, shape, jnp.float32)).astype(w_dtype)

    def b(k, n, scale=0.01):
        return scale * jax.random.normal(k, (n,), jnp.float32)

    def proj_params(k):
        k = jax.random.split(k, 4)
        return {"wp": w(k[0], (F, P)), "bp": b(k[1], P),
                "wfc": w(k[2], (P, P)), "bfc": b(k[3], P),
                "ln_g": jnp.ones((P,), jnp.float32), "ln_b": jnp.zeros((P,), jnp.float32)}

    return {
        "ca": {
            "wv": w(ks[0], (E, E)), "bv": b(ks[1], E),
            "wo": w(ks[2], (E, E)), "bo": b(ks[3], E),
            "ln_g": jnp.ones((E,), jnp.float32), "ln_b": jnp.zeros((E,), jnp.float32),
            "wfc": w(ks[4], (E, E)), "bfc": b(ks[5], E),
        },
        "fc_w": w(ks[6], (E, F)), "fc_b": b(ks[7], F),
        "proj_camera": proj_params(ks[8]),
        "proj_lidar": proj_params(ks[9]),
    }


if __name__ == "__main__":
    key = jax.random.PRNGKey(0)
    k_p, k_cam, k_lid = jax.random.split(key, 3)
    params = init_params(k_p)

    # Stand-ins for encoder_camera(depth_image) / encoder_lidar(lidar_image) outputs.
    cam_feat = jax.random.normal(k_cam, (B, MODEL_DIM), jnp.float32)
    lid_feat = jax.random.normal(k_lid, (B, MODEL_DIM), jnp.float32)

    loss = jax.jit(model_forward)(cam_feat, lid_feat, params)
    jax.block_until_ready(loss)

    ref = reference_forward(cam_feat, lid_feat, params)
    assert jnp.isfinite(loss), "loss is not finite"
    assert abs(float(loss) - float(ref)) < 5e-3, (float(loss), float(ref))
    print("KERNEL_OK")
</pallas_src>

<mosaic_0001>
module attributes {stable_mosaic.version = 11 : i64} {
  func.func @dsi4pr_fused_kernel(%arg0: memref<8x128xf32, #tpu.memory_space<vmem>>, %arg1: memref<8x128xf32, #tpu.memory_space<vmem>>, %arg2: memref<16x256xf32, #tpu.memory_space<vmem>>, %arg3: memref<128x128xbf16, #tpu.memory_space<vmem>>, %arg4: memref<128x128xbf16, #tpu.memory_space<vmem>>, %arg5: memref<128x128xbf16, #tpu.memory_space<vmem>>, %arg6: memref<128x256xbf16, #tpu.memory_space<any>>, %arg7: memref<256x128xbf16, #tpu.memory_space<any>>, %arg8: memref<128x128xbf16, #tpu.memory_space<vmem>>, %arg9: memref<256x128xbf16, #tpu.memory_space<any>>, %arg10: memref<128x128xbf16, #tpu.memory_space<vmem>>, %arg11: memref<1x1xf32, #tpu.memory_space<smem>>, %arg12: memref<128x256xbf16, #tpu.memory_space<vmem>>, %arg13: memref<256x128xbf16, #tpu.memory_space<vmem>>, %arg14: memref<256x128xbf16, #tpu.memory_space<vmem>>, %arg15: memref<3x!tpu.dma_semaphore, #tpu.memory_space<semaphore_mem>>) attributes {dimension_semantics = [], scalar_prefetch = 0 : i64, scratch_operands = 4 : i64, tpu.core_type = #tpu.core_type<tc>} {
    %c0_i32 = arith.constant 0 : i32
    %0 = tpu.memref_slice %arg15[%c0_i32] : memref<3x!tpu.dma_semaphore, #tpu.memory_space<semaphore_mem>> -> memref<1x!tpu.dma_semaphore, #tpu.memory_space<semaphore_mem>>
    %1 = tpu.memref_squeeze %0 : memref<1x!tpu.dma_semaphore, #tpu.memory_space<semaphore_mem>> -> memref<!tpu.dma_semaphore, #tpu.memory_space<semaphore_mem>>
    tpu.enqueue_dma source(%arg6 : memref<128x256xbf16, #tpu.memory_space<any>>) target(%arg12 : memref<128x256xbf16, #tpu.memory_space<vmem>>) target_semaphore(%1 : memref<!tpu.dma_semaphore, #tpu.memory_space<semaphore_mem>>)
    %c1_i32 = arith.constant 1 : i32
    %2 = tpu.memref_slice %arg15[%c1_i32] : memref<3x!tpu.dma_semaphore, #tpu.memory_space<semaphore_mem>> -> memref<1x!tpu.dma_semaphore, #tpu.memory_space<semaphore_mem>>
    %3 = tpu.memref_squeeze %2 : memref<1x!tpu.dma_semaphore, #tpu.memory_space<semaphore_mem>> -> memref<!tpu.dma_semaphore, #tpu.memory_space<semaphore_mem>>
    tpu.enqueue_dma source(%arg7 : memref<256x128xbf16, #tpu.memory_space<any>>) target(%arg13 : memref<256x128xbf16, #tpu.memory_space<vmem>>) target_semaphore(%3 : memref<!tpu.dma_semaphore, #tpu.memory_space<semaphore_mem>>)
    %c2_i32 = arith.constant 2 : i32
    %4 = tpu.memref_slice %arg15[%c2_i32] : memref<3x!tpu.dma_semaphore, #tpu.memory_space<semaphore_mem>> -> memref<1x!tpu.dma_semaphore, #tpu.memory_space<semaphore_mem>>
    %5 = tpu.memref_squeeze %4 : memref<1x!tpu.dma_semaphore, #tpu.memory_space<semaphore_mem>> -> memref<!tpu.dma_semaphore, #tpu.memory_space<semaphore_mem>>
    tpu.enqueue_dma source(%arg9 : memref<256x128xbf16, #tpu.memory_space<any>>) target(%arg14 : memref<256x128xbf16, #tpu.memory_space<vmem>>) target_semaphore(%5 : memref<!tpu.dma_semaphore, #tpu.memory_space<semaphore_mem>>)
    %c0 = arith.constant 0 : index
    %c0_0 = arith.constant 0 : index
    %6 = vector.load %arg2[%c0, %c0_0] : memref<16x256xf32, #tpu.memory_space<vmem>>, vector<16x256xf32>
    %7 = vector.extract_strided_slice %6 {offsets = [0, 0], sizes = [1, 128], strides = [1, 1]} : vector<16x256xf32> to vector<1x128xf32>
    %8 = vector.shape_cast %7 : vector<1x128xf32> to vector<1x128xf32>
    %9 = vector.broadcast %8 : vector<1x128xf32> to vector<8x128xf32>
    %10 = vector.extract_strided_slice %6 {offsets = [1, 0], sizes = [1, 128], strides = [1, 1]} : vector<16x256xf32> to vector<1x128xf32>
    %11 = vector.shape_cast %10 : vector<1x128xf32> to vector<1x128xf32>
    %12 = vector.broadcast %11 : vector<1x128xf32> to vector<8x128xf32>
    %13 = vector.extract_strided_slice %6 {offsets = [2, 0], sizes = [1, 128], strides = [1, 1]} : vector<16x256xf32> to vector<1x128xf32>
    %14 = vector.shape_cast %13 : vector<1x128xf32> to vector<1x128xf32>
    %15 = vector.broadcast %14 : vector<1x128xf32> to vector<8x128xf32>
    %16 = vector.extract_strided_slice %6 {offsets = [3, 0], sizes = [1, 128], strides = [1, 1]} : vector<16x256xf32> to vector<1x128xf32>
    %17 = vector.shape_cast %16 : vector<1x128xf32> to vector<1x128xf32>
    %18 = vector.broadcast %17 : vector<1x128xf32> to vector<8x128xf32>
    %19 = vector.extract_strided_slice %6 {offsets = [4, 0], sizes = [1, 128], strides = [1, 1]} : vector<16x256xf32> to vector<1x128xf32>
    %20 = vector.shape_cast %19 : vector<1x128xf32> to vector<1x128xf32>
    %21 = vector.broadcast %20 : vector<1x128xf32> to vector<8x128xf32>
    %22 = vector.extract_strided_slice %6 {offsets = [5, 0], sizes = [1, 256], strides = [1, 1]} : vector<16x256xf32> to vector<1x256xf32>
    %c0_1 = arith.constant 0 : index
    %c0_2 = arith.constant 0 : index
    %23 = vector.load %arg3[%c0_1, %c0_2] : memref<128x128xbf16, #tpu.memory_space<vmem>>, vector<128x128xbf16>
    %c0_3 = arith.constant 0 : index
    %c0_4 = arith.constant 0 : index
    %24 = vector.load %arg4[%c0_3, %c0_4] : memref<128x128xbf16, #tpu.memory_space<vmem>>, vector<128x128xbf16>
    %c0_5 = arith.constant 0 : index
    %c0_6 = arith.constant 0 : index
    %25 = vector.load %arg5[%c0_5, %c0_6] : memref<128x128xbf16, #tpu.memory_space<vmem>>, vector<128x128xbf16>
    %c0_7 = arith.constant 0 : index
    %c0_8 = arith.constant 0 : index
    %26 = vector.load %arg0[%c0_7, %c0_8] : memref<8x128xf32, #tpu.memory_space<vmem>>, vector<8x128xf32>
    %c0_9 = arith.constant 0 : index
    %c0_10 = arith.constant 0 : index
    %27 = vector.load %arg1[%c0_9, %c0_10] : memref<8x128xf32, #tpu.memory_space<vmem>>, vector<8x128xf32>
    %28 = arith.truncf %27 : vector<8x128xf32> to vector<8x128xbf16>
    %cst = arith.constant dense<0.000000e+00> : vector<8x128xf32>
    %29 = tpu.matmul %28, %23, %cst {dimension_numbers = #tpu.dot_dimension_numbers<[1], [0], [0], [1], [0, 0, 1, 1], [], []>} : vector<8x128xbf16>, vector<128x128xbf16>, vector<8x128xf32> -> vector<8x128xf32>
    %30 = arith.addf %29, %9 : vector<8x128xf32>
    %31 = arith.truncf %30 : vector<8x128xf32> to vector<8x128xbf16>
    %cst_11 = arith.constant dense<0.000000e+00> : vector<8x128xf32>
    %32 = tpu.matmul %31, %24, %cst_11 {dimension_numbers = #tpu.dot_dimension_numbers<[1], [0], [0], [1], [0, 0, 1, 1], [], []>} : vector<8x128xbf16>, vector<128x128xbf16>, vector<8x128xf32> -> vector<8x128xf32>
    %33 = arith.addf %32, %12 : vector<8x128xf32>
    %34 = arith.addf %26, %33 : vector<8x128xf32>
    %cst_12 = arith.constant dense<0.000000e+00> : vector<8xf32>
    %35 = vector.multi_reduction <add>, %34, %cst_12 [1] : vector<8x128xf32> to vector<8xf32>
    %36 = vector.shape_cast %35 : vector<8xf32> to vector<8x1xf32>
    %cst_13 = arith.constant 7.812500e-03 : f32
    %37 = vector.broadcast %cst_13 : f32 to vector<8x1xf32>
    %38 = arith.mulf %36, %37 : vector<8x1xf32>
    %39 = vector.broadcast %38 : vector<8x1xf32> to vector<8x128xf32>
    %40 = arith.subf %34, %39 : vector<8x128xf32>
    %41 = arith.mulf %40, %40 : vector<8x128xf32>
    %cst_14 = arith.constant dense<0.000000e+00> : vector<8xf32>
    %42 = vector.multi_reduction <add>, %41, %cst_14 [1] : vector<8x128xf32> to vector<8xf32>
    %43 = vector.shape_cast %42 : vector<8xf32> to vector<8x1xf32>
    %cst_15 = arith.constant 7.812500e-03 : f32
    %44 = vector.broadcast %cst_15 : f32 to vector<8x1xf32>
    %45 = arith.mulf %43, %44 : vector<8x1xf32>
    %cst_16 = arith.constant 9.99999974E-6 : f32
    %46 = vector.broadcast %cst_16 : f32 to vector<8x1xf32>
    %47 = arith.addf %45, %46 : vector<8x1xf32>
    %48 = math.rsqrt %47 : vector<8x1xf32>
    %49 = vector.broadcast %48 : vector<8x1xf32> to vector<8x128xf32>
    %50 = arith.mulf %40, %49 : vector<8x128xf32>
    %51 = arith.mulf %50, %15 : vector<8x128xf32>
    %52 = arith.addf %51, %18 : vector<8x128xf32>
    %cst_17 = arith.constant 5.000000e-01 : f32
    %53 = vector.broadcast %cst_17 : f32 to vector<8x128xf32>
    %54 = arith.mulf %53, %52 : vector<8x128xf32>
    %cst_18 = arith.constant 0.707106769 : f32
    %55 = vector.broadcast %cst_18 : f32 to vector<8x128xf32>
    %56 = arith.mulf %52, %55 : vector<8x128xf32>
    %57 = math.erf %56 : vector<8x128xf32>
    %cst_19 = arith.constant 1.000000e+00 : f32
    %58 = vector.broadcast %cst_19 : f32 to vector<8x128xf32>
    %59 = arith.addf %58, %57 : vector<8x128xf32>
    %60 = arith.mulf %54, %59 : vector<8x128xf32>
    %61 = arith.truncf %60 : vector<8x128xf32> to vector<8x128xbf16>
    %cst_20 = arith.constant dense<0.000000e+00> : vector<8x128xf32>
    %62 = tpu.matmul %61, %25, %cst_20 {dimension_numbers = #tpu.dot_dimension_numbers<[1], [0], [0], [1], [0, 0, 1, 1], [], []>} : vector<8x128xbf16>, vector<128x128xbf16>, vector<8x128xf32> -> vector<8x128xf32>
    %63 = arith.addf %62, %21 : vector<8x128xf32>
    %64 = arith.truncf %63 : vector<8x128xf32> to vector<8x128xbf16>
    %cst_21 = arith.constant dense<0.000000e+00> : vector<8x128xf32>
    %65 = tpu.matmul %64, %23, %cst_21 {dimension_numbers = #tpu.dot_dimension_numbers<[1], [0], [0], [1], [0, 0, 1, 1], [], []>} : vector<8x128xbf16>, vector<128x128xbf16>, vector<8x128xf32> -> vector<8x128xf32>
    %66 = arith.addf %65, %9 : vector<8x128xf32>
    %67 = arith.truncf %66 : vector<8x128xf32> to vector<8x128xbf16>
    %cst_22 = arith.constant dense<0.000000e+00> : vector<8x128xf32>
    %68 = tpu.matmul %67, %24, %cst_22 {dimension_numbers = #tpu.dot_dimension_numbers<[1], [0], [0], [1], [0, 0, 1, 1], [], []>} : vector<8x128xbf16>, vector<128x128xbf16>, vector<8x128xf32> -> vector<8x128xf32>
    %69 = arith.addf %68, %12 : vector<8x128xf32>
    %70 = arith.addf %27, %69 : vector<8x128xf32>
    %cst_23 = arith.constant dense<0.000000e+00> : vector<8xf32>
    %71 = vector.multi_reduction <add>, %70, %cst_23 [1] : vector<8x128xf32> to vector<8xf32>
    %72 = vector.shape_cast %71 : vector<8xf32> to vector<8x1xf32>
    %cst_24 = arith.constant 7.812500e-03 : f32
    %73 = vector.broadcast %cst_24 : f32 to vector<8x1xf32>
    %74 = arith.mulf %72, %73 : vector<8x1xf32>
    %75 = vector.broadcast %74 : vector<8x1xf32> to vector<8x128xf32>
    %76 = arith.subf %70, %75 : vector<8x128xf32>
    %77 = arith.mulf %76, %76 : vector<8x128xf32>
    %cst_25 = arith.constant dense<0.000000e+00> : vector<8xf32>
    %78 = vector.multi_reduction <add>, %77, %cst_25 [1] : vector<8x128xf32> to vector<8xf32>
    %79 = vector.shape_cast %78 : vector<8xf32> to vector<8x1xf32>
    %cst_26 = arith.constant 7.812500e-03 : f32
    %80 = vector.broadcast %cst_26 : f32 to vector<8x1xf32>
    %81 = arith.mulf %79, %80 : vector<8x1xf32>
    %cst_27 = arith.constant 9.99999974E-6 : f32
    %82 = vector.broadcast %cst_27 : f32 to vector<8x1xf32>
    %83 = arith.addf %81, %82 : vector<8x1xf32>
    %84 = math.rsqrt %83 : vector<8x1xf32>
    %85 = vector.broadcast %84 : vector<8x1xf32> to vector<8x128xf32>
    %86 = arith.mulf %76, %85 : vector<8x128xf32>
    %87 = arith.mulf %86, %15 : vector<8x128xf32>
    %88 = arith.addf %87, %18 : vector<8x128xf32>
    %cst_28 = arith.constant 5.000000e-01 : f32
    %89 = vector.broadcast %cst_28 : f32 to vector<8x128xf32>
    %90 = arith.mulf %89, %88 : vector<8x128xf32>
    %cst_29 = arith.constant 0.707106769 : f32
    %91 = vector.broadcast %cst_29 : f32 to vector<8x128xf32>
    %92 = arith.mulf %88, %91 : vector<8x128xf32>
    %93 = math.erf %92 : vector<8x128xf32>
    %cst_30 = arith.constant 1.000000e+00 : f32
    %94 = vector.broadcast %cst_30 : f32 to vector<8x128xf32>
    %95 = arith.addf %94, %93 : vector<8x128xf32>
    %96 = arith.mulf %90, %95 : vector<8x128xf32>
    %97 = arith.truncf %96 : vector<8x128xf32> to vector<8x128xbf16>
    %cst_31 = arith.constant dense<0.000000e+00> : vector<8x128xf32>
    %98 = tpu.matmul %97, %25, %cst_31 {dimension_numbers = #tpu.dot_dimension_numbers<[1], [0], [0], [1], [0, 0, 1, 1], [], []>} : vector<8x128xbf16>, vector<128x128xbf16>, vector<8x128xf32> -> vector<8x128xf32>
    %99 = arith.addf %98, %21 : vector<8x128xf32>
    %c0_i32_32 = arith.constant 0 : i32
    %100 = tpu.memref_slice %arg15[%c0_i32_32] : memref<3x!tpu.dma_semaphore, #tpu.memory_space<semaphore_mem>> -> memref<1x!tpu.dma_semaphore, #tpu.memory_space<semaphore_mem>>
    %101 = tpu.memref_squeeze %100 : memref<1x!tpu.dma_semaphore, #tpu.memory_space<semaphore_mem>> -> memref<!tpu.dma_semaphore, #tpu.memory_space<semaphore_mem>>
    tpu.wait_dma2 semaphore(%101 : memref<!tpu.dma_semaphore, #tpu.memory_space<semaphore_mem>>) src(%arg6 : memref<128x256xbf16, #tpu.memory_space<any>>) dst(%arg12 : memref<128x256xbf16, #tpu.memory_space<vmem>>)
    %c0_33 = arith.constant 0 : index
    %c0_34 = arith.constant 0 : index
    %102 = vector.load %arg12[%c0_33, %c0_34] : memref<128x256xbf16, #tpu.memory_space<vmem>>, vector<128x256xbf16>
    %103 = arith.truncf %63 : vector<8x128xf32> to vector<8x128xbf16>
    %cst_35 = arith.constant dense<0.000000e+00> : vector<8x256xf32>
    %104 = tpu.matmul %103, %102, %cst_35 {dimension_numbers = #tpu.dot_dimension_numbers<[1], [0], [0], [1], [0, 0, 1, 1], [], []>} : vector<8x128xbf16>, vector<128x256xbf16>, vector<8x256xf32> -> vector<8x256xf32>
    %105 = vector.broadcast %22 : vector<1x256xf32> to vector<8x256xf32>
    %106 = arith.addf %104, %105 : vector<8x256xf32>
    %cst_36 = arith.constant 0.000000e+00 : f32
    %107 = vector.broadcast %cst_36 : f32 to vector<8x256xf32>
    %108 = arith.maximumf %106, %107 : vector<8x256xf32>
    %109 = arith.truncf %99 : vector<8x128xf32> to vector<8x128xbf16>
    %cst_37 = arith.constant dense<0.000000e+00> : vector<8x256xf32>
    %110 = tpu.matmul %109, %102, %cst_37 {dimension_numbers = #tpu.dot_dimension_numbers<[1], [0], [0], [1], [0, 0, 1, 1], [], []>} : vector<8x128xbf16>, vector<128x256xbf16>, vector<8x256xf32> -> vector<8x256xf32>
    %111 = vector.broadcast %22 : vector<1x256xf32> to vector<8x256xf32>
    %112 = arith.addf %110, %111 : vector<8x256xf32>
    %cst_38 = arith.constant 0.000000e+00 : f32
    %113 = vector.broadcast %cst_38 : f32 to vector<8x256xf32>
    %114 = arith.maximumf %112, %113 : vector<8x256xf32>
    %c1_i32_39 = arith.constant 1 : i32
    %115 = tpu.memref_slice %arg15[%c1_i32_39] : memref<3x!tpu.dma_semaphore, #tpu.memory_space<semaphore_mem>> -> memref<1x!tpu.dma_semaphore, #tpu.memory_space<semaphore_mem>>
    %116 = tpu.memref_squeeze %115 : memref<1x!tpu.dma_semaphore, #tpu.memory_space<semaphore_mem>> -> memref<!tpu.dma_semaphore, #tpu.memory_space<semaphore_mem>>
    tpu.wait_dma2 semaphore(%116 : memref<!tpu.dma_semaphore, #tpu.memory_space<semaphore_mem>>) src(%arg7 : memref<256x128xbf16, #tpu.memory_space<any>>) dst(%arg13 : memref<256x128xbf16, #tpu.memory_space<vmem>>)
    %c2_i32_40 = arith.constant 2 : i32
    %117 = tpu.memref_slice %arg15[%c2_i32_40] : memref<3x!tpu.dma_semaphore, #tpu.memory_space<semaphore_mem>> -> memref<1x!tpu.dma_semaphore, #tpu.memory_space<semaphore_mem>>
    %118 = tpu.memref_squeeze %117 : memref<1x!tpu.dma_semaphore, #tpu.memory_space<semaphore_mem>> -> memref<!tpu.dma_semaphore, #tpu.memory_space<semaphore_mem>>
    tpu.wait_dma2 semaphore(%118 : memref<!tpu.dma_semaphore, #tpu.memory_space<semaphore_mem>>) src(%arg9 : memref<256x128xbf16, #tpu.memory_space<any>>) dst(%arg14 : memref<256x128xbf16, #tpu.memory_space<vmem>>)
    %c0_41 = arith.constant 0 : index
    %c0_42 = arith.constant 0 : index
    %119 = vector.load %arg13[%c0_41, %c0_42] : memref<256x128xbf16, #tpu.memory_space<vmem>>, vector<256x128xbf16>
    %c0_43 = arith.constant 0 : index
    %c0_44 = arith.constant 0 : index
    %120 = vector.load %arg8[%c0_43, %c0_44] : memref<128x128xbf16, #tpu.memory_space<vmem>>, vector<128x128xbf16>
    %121 = vector.extract_strided_slice %6 {offsets = [6, 0], sizes = [1, 128], strides = [1, 1]} : vector<16x256xf32> to vector<1x128xf32>
    %122 = vector.extract_strided_slice %6 {offsets = [7, 0], sizes = [1, 128], strides = [1, 1]} : vector<16x256xf32> to vector<1x128xf32>
    %123 = vector.extract_strided_slice %6 {offsets = [8, 0], sizes = [1, 128], strides = [1, 1]} : vector<16x256xf32> to vector<1x128xf32>
    %124 = vector.extract_strided_slice %6 {offsets = [9, 0], sizes = [1, 128], strides = [1, 1]} : vector<16x256xf32> to vector<1x128xf32>
    %125 = arith.truncf %108 : vector<8x256xf32> to vector<8x256xbf16>
    %cst_45 = arith.constant dense<0.000000e+00> : vector<8x128xf32>
    %126 = tpu.matmul %125, %119, %cst_45 {dimension_numbers = #tpu.dot_dimension_numbers<[1], [0], [0], [1], [0, 0, 1, 1], [], []>} : vector<8x256xbf16>, vector<256x128xbf16>, vector<8x128xf32> -> vector<8x128xf32>
    %127 = vector.broadcast %121 : vector<1x128xf32> to vector<8x128xf32>
    %128 = arith.addf %126, %127 : vector<8x128xf32>
    %cst_46 = arith.constant 5.000000e-01 : f32
    %129 = vector.broadcast %cst_46 : f32 to vector<8x128xf32>
    %130 = arith.mulf %129, %128 : vector<8x128xf32>
    %cst_47 = arith.constant 0.707106769 : f32
    %131 = vector.broadcast %cst_47 : f32 to vector<8x128xf32>
    %132 = arith.mulf %128, %131 : vector<8x128xf32>
    %133 = math.erf %132 : vector<8x128xf32>
    %cst_48 = arith.constant 1.000000e+00 : f32
    %134 = vector.broadcast %cst_48 : f32 to vector<8x128xf32>
    %135 = arith.addf %134, %133 : vector<8x128xf32>
    %136 = arith.mulf %130, %135 : vector<8x128xf32>
    %137 = arith.truncf %136 : vector<8x128xf32> to vector<8x128xbf16>
    %cst_49 = arith.constant dense<0.000000e+00> : vector<8x128xf32>
    %138 = tpu.matmul %137, %120, %cst_49 {dimension_numbers = #tpu.dot_dimension_numbers<[1], [0], [0], [1], [0, 0, 1, 1], [], []>} : vector<8x128xbf16>, vector<128x128xbf16>, vector<8x128xf32> -> vector<8x128xf32>
    %139 = vector.broadcast %122 : vector<1x128xf32> to vector<8x128xf32>
    %140 = arith.addf %138, %139 : vector<8x128xf32>
    %141 = arith.addf %140, %128 : vector<8x128xf32>
    %cst_50 = arith.constant dense<0.000000e+00> : vector<8xf32>
    %142 = vector.multi_reduction <add>, %141, %cst_50 [1] : vector<8x128xf32> to vector<8xf32>
    %143 = vector.shape_cast %142 : vector<8xf32> to vector<8x1xf32>
    %cst_51 = arith.constant 7.812500e-03 : f32
    %144 = vector.broadcast %cst_51 : f32 to vector<8x1xf32>
    %145 = arith.mulf %143, %144 : vector<8x1xf32>
    %146 = vector.broadcast %145 : vector<8x1xf32> to vector<8x128xf32>
    %147 = arith.subf %141, %146 : vector<8x128xf32>
    %148 = arith.mulf %147, %147 : vector<8x128xf32>
    %cst_52 = arith.constant dense<0.000000e+00> : vector<8xf32>
    %149 = vector.multi_reduction <add>, %148, %cst_52 [1] : vector<8x128xf32> to vector<8xf32>
    %150 = vector.shape_cast %149 : vector<8xf32> to vector<8x1xf32>
    %cst_53 = arith.constant 7.812500e-03 : f32
    %151 = vector.broadcast %cst_53 : f32 to vector<8x1xf32>
    %152 = arith.mulf %150, %151 : vector<8x1xf32>
    %cst_54 = arith.constant 9.99999974E-6 : f32
    %153 = vector.broadcast %cst_54 : f32 to vector<8x1xf32>
    %154 = arith.addf %152, %153 : vector<8x1xf32>
    %155 = math.rsqrt %154 : vector<8x1xf32>
    %156 = vector.broadcast %155 : vector<8x1xf32> to vector<8x128xf32>
    %157 = arith.mulf %147, %156 : vector<8x128xf32>
    %158 = vector.broadcast %123 : vector<1x128xf32> to vector<8x128xf32>
    %159 = arith.mulf %157, %158 : vector<8x128xf32>
    %160 = vector.broadcast %124 : vector<1x128xf32> to vector<8x128xf32>
    %161 = arith.addf %159, %160 : vector<8x128xf32>
    %c0_55 = arith.constant 0 : index
    %c0_56 = arith.constant 0 : index
    %162 = vector.load %arg14[%c0_55, %c0_56] : memref<256x128xbf16, #tpu.memory_space<vmem>>, vector<256x128xbf16>
    %c0_57 = arith.constant 0 : index
    %c0_58 = arith.constant 0 : index
    %163 = vector.load %arg10[%c0_57, %c0_58] : memref<128x128xbf16, #tpu.memory_space<vmem>>, vector<128x128xbf16>
    %164 = vector.extract_strided_slice %6 {offsets = [10, 0], sizes = [1, 128], strides = [1, 1]} : vector<16x256xf32> to vector<1x128xf32>
    %165 = vector.extract_strided_slice %6 {offsets = [11, 0], sizes = [1, 128], strides = [1, 1]} : vector<16x256xf32> to vector<1x128xf32>
    %166 = vector.extract_strided_slice %6 {offsets = [12, 0], sizes = [1, 128], strides = [1, 1]} : vector<16x256xf32> to vector<1x128xf32>
    %167 = vector.extract_strided_slice %6 {offsets = [13, 0], sizes = [1, 128], strides = [1, 1]} : vector<16x256xf32> to vector<1x128xf32>
    %168 = arith.truncf %114 : vector<8x256xf32> to vector<8x256xbf16>
    %cst_59 = arith.constant dense<0.000000e+00> : vector<8x128xf32>
    %169 = tpu.matmul %168, %162, %cst_59 {dimension_numbers = #tpu.dot_dimension_numbers<[1], [0], [0], [1], [0, 0, 1, 1], [], []>} : vector<8x256xbf16>, vector<256x128xbf16>, vector<8x128xf32> -> vector<8x128xf32>
    %170 = vector.broadcast %164 : vector<1x128xf32> to vector<8x128xf32>
    %171 = arith.addf %169, %170 : vector<8x128xf32>
    %cst_60 = arith.constant 5.000000e-01 : f32
    %172 = vector.broadcast %cst_60 : f32 to vector<8x128xf32>
    %173 = arith.mulf %172, %171 : vector<8x128xf32>
    %cst_61 = arith.constant 0.707106769 : f32
    %174 = vector.broadcast %cst_61 : f32 to vector<8x128xf32>
    %175 = arith.mulf %171, %174 : vector<8x128xf32>
    %176 = math.erf %175 : vector<8x128xf32>
    %cst_62 = arith.constant 1.000000e+00 : f32
    %177 = vector.broadcast %cst_62 : f32 to vector<8x128xf32>
    %178 = arith.addf %177, %176 : vector<8x128xf32>
    %179 = arith.mulf %173, %178 : vector<8x128xf32>
    %180 = arith.truncf %179 : vector<8x128xf32> to vector<8x128xbf16>
    %cst_63 = arith.constant dense<0.000000e+00> : vector<8x128xf32>
    %181 = tpu.matmul %180, %163, %cst_63 {dimension_numbers = #tpu.dot_dimension_numbers<[1], [0], [0], [1], [0, 0, 1, 1], [], []>} : vector<8x128xbf16>, vector<128x128xbf16>, vector<8x128xf32> -> vector<8x128xf32>
    %182 = vector.broadcast %165 : vector<1x128xf32> to vector<8x128xf32>
    %183 = arith.addf %181, %182 : vector<8x128xf32>
    %184 = arith.addf %183, %171 : vector<8x128xf32>
    %cst_64 = arith.constant dense<0.000000e+00> : vector<8xf32>
    %185 = vector.multi_reduction <add>, %184, %cst_64 [1] : vector<8x128xf32> to vector<8xf32>
    %186 = vector.shape_cast %185 : vector<8xf32> to vector<8x1xf32>
    %cst_65 = arith.constant 7.812500e-03 : f32
    %187 = vector.broadcast %cst_65 : f32 to vector<8x1xf32>
    %188 = arith.mulf %186, %187 : vector<8x1xf32>
    %189 = vector.broadcast %188 : vector<8x1xf32> to vector<8x128xf32>
    %190 = arith.subf %184, %189 : vector<8x128xf32>
    %191 = arith.mulf %190, %190 : vector<8x128xf32>
    %cst_66 = arith.constant dense<0.000000e+00> : vector<8xf32>
    %192 = vector.multi_reduction <add>, %191, %cst_66 [1] : vector<8x128xf32> to vector<8xf32>
    %193 = vector.shape_cast %192 : vector<8xf32> to vector<8x1xf32>
    %cst_67 = arith.constant 7.812500e-03 : f32
    %194 = vector.broadcast %cst_67 : f32 to vector<8x1xf32>
    %195 = arith.mulf %193, %194 : vector<8x1xf32>
    %cst_68 = arith.constant 9.99999974E-6 : f32
    %196 = vector.broadcast %cst_68 : f32 to vector<8x1xf32>
    %197 = arith.addf %195, %196 : vector<8x1xf32>
    %198 = math.rsqrt %197 : vector<8x1xf32>
    %199 = vector.broadcast %198 : vector<8x1xf32> to vector<8x128xf32>
    %200 = arith.mulf %190, %199 : vector<8x128xf32>
    %201 = vector.broadcast %166 : vector<1x128xf32> to vector<8x128xf32>
    %202 = arith.mulf %200, %201 : vector<8x128xf32>
    %203 = vector.broadcast %167 : vector<1x128xf32> to vector<8x128xf32>
    %204 = arith.addf %202, %203 : vector<8x128xf32>
    %cst_69 = arith.constant dense<0.000000e+00> : vector<8x8xf32>
    %205 = tpu.matmul %204, %161, %cst_69 {dimension_numbers = #tpu.dot_dimension_numbers<[1], [1], [0], [0], [0, 0, 1, 0], [], []>} : vector<8x128xf32>, vector<8x128xf32>, vector<8x8xf32> -> vector<8x8xf32>
    %cst_70 = arith.constant 1.000000e+00 : f32
    %206 = vector.broadcast %cst_70 : f32 to vector<8x8xf32>
    %207 = arith.mulf %205, %206 : vector<8x8xf32>
    %cst_71 = arith.constant dense<0.000000e+00> : vector<8x8xf32>
    %208 = tpu.matmul %161, %161, %cst_71 {dimension_numbers = #tpu.dot_dimension_numbers<[1], [1], [0], [0], [0, 0, 1, 0], [], []>} : vector<8x128xf32>, vector<8x128xf32>, vector<8x8xf32> -> vector<8x8xf32>
    %cst_72 = arith.constant dense<0.000000e+00> : vector<8x8xf32>
    %209 = tpu.matmul %204, %204, %cst_72 {dimension_numbers = #tpu.dot_dimension_numbers<[1], [1], [0], [0], [0, 0, 1, 0], [], []>} : vector<8x128xf32>, vector<8x128xf32>, vector<8x8xf32> -> vector<8x8xf32>
    %210 = arith.addf %208, %209 : vector<8x8xf32>
    %cst_73 = arith.constant 5.000000e-01 : f32
    %211 = vector.broadcast %cst_73 : f32 to vector<8x8xf32>
    %212 = arith.mulf %210, %211 : vector<8x8xf32>
    %cst_74 = arith.constant dense<0xFF800000> : vector<8xf32>
    %213 = vector.multi_reduction <maximumf>, %212, %cst_74 [1] : vector<8x8xf32> to vector<8xf32>
    %214 = vector.shape_cast %213 : vector<8xf32> to vector<8x1xf32>
    %215 = vector.broadcast %214 : vector<8x1xf32> to vector<8x8xf32>
    %216 = arith.subf %212, %215 : vector<8x8xf32>
    %217 = math.exp %216 : vector<8x8xf32>
    %cst_75 = arith.constant dense<0.000000e+00> : vector<8xf32>
    %218 = vector.multi_reduction <add>, %217, %cst_75 [1] : vector<8x8xf32> to vector<8xf32>
    %219 = vector.shape_cast %218 : vector<8xf32> to vector<8x1xf32>
    %220 = vector.broadcast %219 : vector<8x1xf32> to vector<8x8xf32>
    %221 = arith.divf %217, %220 : vector<8x8xf32>
    %cst_76 = arith.constant dense<0xFF800000> : vector<8xf32>
    %222 = vector.multi_reduction <maximumf>, %207, %cst_76 [1] : vector<8x8xf32> to vector<8xf32>
    %223 = vector.shape_cast %222 : vector<8xf32> to vector<8x1xf32>
    %224 = vector.broadcast %223 : vector<8x1xf32> to vector<8x8xf32>
    %225 = arith.subf %207, %224 : vector<8x8xf32>
    %226 = math.exp %225 : vector<8x8xf32>
    %cst_77 = arith.constant dense<0.000000e+00> : vector<8xf32>
    %227 = vector.multi_reduction <add>, %226, %cst_77 [1] : vector<8x8xf32> to vector<8xf32>
    %228 = vector.shape_cast %227 : vector<8xf32> to vector<8x1xf32>
    %229 = math.log %228 : vector<8x1xf32>
    %230 = vector.broadcast %229 : vector<8x1xf32> to vector<8x8xf32>
    %231 = arith.subf %225, %230 : vector<8x8xf32>
    %cst_78 = arith.constant dense<0xFF800000> : vector<8xf32>
    %232 = vector.multi_reduction <maximumf>, %207, %cst_78 [0] : vector<8x8xf32> to vector<8xf32>
    %233 = vector.shape_cast %232 : vector<8xf32> to vector<1x8xf32>
    %234 = vector.broadcast %233 : vector<1x8xf32> to vector<8x8xf32>
    %235 = arith.subf %207, %234 : vector<8x8xf32>
    %236 = math.exp %235 : vector<8x8xf32>
    %cst_79 = arith.constant dense<0.000000e+00> : vector<8xf32>
    %237 = vector.multi_reduction <add>, %236, %cst_79 [0] : vector<8x8xf32> to vector<8xf32>
    %238 = vector.shape_cast %237 : vector<8xf32> to vector<1x8xf32>
    %239 = math.log %238 : vector<1x8xf32>
    %240 = vector.broadcast %239 : vector<1x8xf32> to vector<8x8xf32>
    %241 = arith.subf %235, %240 : vector<8x8xf32>
    %cst_80 = arith.constant 0.000000e+00 : f32
    %242 = vector.broadcast %cst_80 : f32 to vector<8x8xf32>
    %243 = arith.subf %242, %221 : vector<8x8xf32>
    %244 = arith.mulf %243, %231 : vector<8x8xf32>
    %245 = vector.shape_cast %244 : vector<8x8xf32> to vector<1x8x8xf32>
    %cst_81 = arith.constant dense<0.000000e+00> : vector<1xf32>
    %246 = vector.multi_reduction <add>, %245, %cst_81 [1, 2] : vector<1x8x8xf32> to vector<1xf32>
    %247 = vector.shape_cast %246 : vector<1xf32> to vector<1x1x1xf32>
    %248 = vector.extract %247[0, 0, 0] : f32 from vector<1x1x1xf32>
    %cst_82 = arith.constant 0.000000e+00 : f32
    %249 = vector.broadcast %cst_82 : f32 to vector<8x8xf32>
    %250 = arith.subf %249, %221 : vector<8x8xf32>
    %251 = arith.mulf %250, %241 : vector<8x8xf32>
    %252 = vector.shape_cast %251 : vector<8x8xf32> to vector<1x8x8xf32>
    %cst_83 = arith.constant dense<0.000000e+00> : vector<1xf32>
    %253 = vector.multi_reduction <add>, %252, %cst_83 [1, 2] : vector<1x8x8xf32> to vector<1xf32>
    %254 = vector.shape_cast %253 : vector<1xf32> to vector<1x1x1xf32>
    %255 = vector.extract %254[0, 0, 0] : f32 from vector<1x1x1xf32>
    %256 = arith.addf %248, %255 : f32
    %cst_84 = arith.constant 6.250000e-02 : f32
    %257 = arith.mulf %256, %cst_84 : f32
    %c0_85 = arith.constant 0 : index
    %c0_86 = arith.constant 0 : index
    %258 = memref.load %arg11[%c0_85, %c0_86] : memref<1x1xf32, #tpu.memory_space<smem>>
    memref.store %257, %arg11[%c0_85, %c0_86] : memref<1x1xf32, #tpu.memory_space<smem>>
    return
  }
}

</mosaic_0001>

<llo_original>
// kernel: model_forward.1
$region0: #{model_forward.1}
  #allocation0 [shape = 'u32[]', space=smem, size = 0x4, offset = 0x4, fixed_abs, tag = 'smem constant byte address 0x4 - core index']
  #allocation1 [shape = 'u32[72,128]{1,0:T(1,128)}', space=vmem, size = 0x9000, scoped, tag = 'internal scratch']
  #allocation2 [shape = 'bf16[128,256]{1,0:T(8,128)(2,1)}', space=vmem, size = 0x10000, scoped, tag = 'scratch operand']
  #allocation3 [shape = 'bf16[256,128]{1,0:T(8,128)(2,1)}', space=vmem, size = 0x10000, scoped, tag = 'scratch operand']
  #allocation4 [shape = 'bf16[256,128]{1,0:T(8,128)(2,1)}', space=vmem, size = 0x10000, scoped, tag = 'scratch operand']
  #allocation5 [shape = 's32[3]{0}', space=sflag, size = 0xc, scoped, tag = 'scratch operand']
  #allocation15 [shape = 's32[]', space=sflag, size = 0x4, offset = 0, fixed_abs, tag = 'sflag constant byte address 0x0 - dummy sync flag']
  #allocation16 [shape = 's32[]', space=sflag, size = 0x4, offset = 0, fixed_abs, tag = 'sflag constant byte address 0x0 - dummy sync flag']
  #allocation17 [shape = 'u32[]', space=smem, size = 0x4, offset = 0x44, fixed_abs, tag = 'smem constant byte address 0x44 - assertion arg 0']
  #allocation18 [shape = 'u32[]', space=smem, size = 0x4, offset = 0x48, fixed_abs, tag = 'smem constant byte address 0x48 - assertion arg 1']
  #allocation19 [shape = 's32[]', space=sflag, size = 0x4, offset = 0, fixed_abs, tag = 'sflag constant byte address 0x0 - dummy sync flag']
  #allocation20 [shape = 's32[]', space=sflag, size = 0x4, offset = 0, fixed_abs, tag = 'sflag constant byte address 0x0 - dummy sync flag']
  #allocation21 [shape = 's32[]', space=sflag, size = 0x4, offset = 0, fixed_abs, tag = 'sflag constant byte address 0x0 - dummy sync flag']
  #allocation22 [shape = 's32[]', space=sflag, size = 0x4, offset = 0, fixed_abs, tag = 'sflag constant byte address 0x0 - dummy sync flag']
  %s0 = inlined_call_operand.vmem [shape: f32[8,128], index: 0, kind: input, shape index: {}]
  %s1 = inlined_call_operand.vmem [shape: f32[8,128], index: 1, kind: input, shape index: {}]
  %s2 = inlined_call_operand.vmem [shape: f32[16,256], index: 2, kind: input, shape index: {}]
  %s3 = inlined_call_operand.vmem [shape: bf16[128,128], index: 3, kind: input, shape index: {}]
  %s4 = inlined_call_operand.hbm [shape: bf16[128,128], index: 4, kind: input, shape index: {}]
  %s5 = inlined_call_operand.hbm [shape: bf16[128,128], index: 5, kind: input, shape index: {}]
  %s6 = inlined_call_operand.hbm [shape: bf16[128,256], index: 6, kind: input, shape index: {}]
  %s7 = inlined_call_operand.hbm [shape: bf16[256,128], index: 7, kind: input, shape index: {}]
  %s8 = inlined_call_operand.hbm [shape: bf16[128,128], index: 8, kind: input, shape index: {}]
  %s9 = inlined_call_operand.hbm [shape: bf16[256,128], index: 9, kind: input, shape index: {}]
  %s10 = inlined_call_operand.hbm [shape: bf16[128,128], index: 10, kind: input, shape index: {}]
  %s11 = inlined_call_operand.hbm [shape: f32[1,1], index: 11, kind: output, shape index: {}]
  %s12 = sld [smem:[#allocation0]]
  $region70: #{model_forward.1} parent=0
    _
  %s14 = ssub.s32 1, %s12
  %s15 = scalar_select 0, %s14, %s12
  $region1: #{model_forward.1} parent=0
    #allocation6 [shape = 'u8[32768]{0}', space=vmem, size = 0x8000, scoped, tag = 'input window, operand 4, single buffered']
    #allocation7 [shape = 's32[1]{0}', space=sflag, size = 0x4, scoped, tag = 'scoped memory for model_forward.1']
    #allocation8 [shape = 's32[1]{0}', space=sflag, size = 0x4, scoped, tag = 'scoped memory for model_forward.1']
    #allocation9 [shape = 'u8[32768]{0}', space=vmem, size = 0x8000, scoped, tag = 'input window, operand 5, single buffered']
    #allocation10 [shape = 's32[1]{0}', space=sflag, size = 0x4, scoped, tag = 'scoped memory for model_forward.1']
    #allocation11 [shape = 'u8[32768]{0}', space=vmem, size = 0x8000, scoped, tag = 'input window, operand 8, single buffered']
    #allocation12 [shape = 'u8[32768]{0}', space=vmem, size = 0x8000, scoped, tag = 'input window, operand 10, single buffered']
    #allocation13 [shape = 's32[1]{0}', space=sflag, size = 0x4, scoped, tag = 'scoped memory for model_forward.1']
    #allocation14 [shape = 'u8[512]{0}', space=smem, size = 0x200, scoped, tag = 'output window, operand 0, single buffered']
    %16 = vsyncpa [#allocation7], 0
    %17 = vsyncpa [#allocation10], 0
    %18 = vsyncpa [#allocation13], 0
    %19 = vsyncpa [#allocation8], 0
    // Predicated region
    $region2: #{model_forward.1} parent=1 // pred_check
      _
    $region3: #{model_forward.1} parent=1 // pred_check_branch
      %21 = sbr.rel (0) target = $region5
    $region4: #{model_forward.1} parent=1 // pred_region
      _
    $region5: #{model_forward.1} parent=1 // pred_fallthru
      _
    // Predicated region
    $region6: #{model_forward.1} parent=1 // pred_check
      _
    $region7: #{model_forward.1} parent=1 // pred_check_branch
      %23 = sbr.rel (0) target = $region9
    $region8: #{model_forward.1} parent=1 // pred_region
      _
    $region9: #{model_forward.1} parent=1 // pred_fallthru
      _
    // Predicated region
    $region10: #{model_forward.1} parent=1 // pred_check
      _
    $region11: #{model_forward.1} parent=1 // pred_check_branch
      %25 = sbr.rel (0) target = $region13
    $region12: #{model_forward.1} parent=1 // pred_region
      _
    $region13: #{model_forward.1} parent=1 // pred_fallthru
      _
    // Predicated region
    $region14: #{model_forward.1} parent=1 // pred_check
      _
    $region15: #{model_forward.1} parent=1 // pred_check_branch
      %27 = sbr.rel (0) target = $region17
    $region16: #{model_forward.1} parent=1 // pred_region
      _
    $region17: #{model_forward.1} parent=1 // pred_fallthru
      _
    // Predicated region
    $region18: #{model_forward.1} parent=1 // pred_check
      _
    $region19: #{model_forward.1} parent=1 // pred_check_branch
      %29 = sbr.rel (0) target = $region21
    $region20: #{model_forward.1} parent=1 // pred_region
      %31 = vsyncadd [#allocation7], 0
      %s32 = sshll.u32 %s4, 4
      %s33 = int_to_ptr.hbm [resolvable:$true] %s32
      %s34 = sshll.u32 [#allocation6], 4
      %s35 = int_to_ptr.vmem [resolvable:$true] %s34
      %40 = dma.hbm_to_vmem [thread:$0]  %s33, 1024, %s35, [#allocation7], 64, 64, 4
    $region21: #{model_forward.1} parent=1 // pred_fallthru
      _
    // Predicated region
    $region22: #{model_forward.1} parent=1 // pred_check
      _
    $region23: #{model_forward.1} parent=1 // pred_check_branch
      %42 = sbr.rel (0) target = $region25
    $region24: #{model_forward.1} parent=1 // pred_region
      %44 = vsyncadd [#allocation10], 0
      %s45 = sshll.u32 %s5, 4
      %s46 = int_to_ptr.hbm [resolvable:$true] %s45
      %s47 = sshll.u32 [#allocation9], 4
      %s48 = int_to_ptr.vmem [resolvable:$true] %s47
      %53 = dma.hbm_to_vmem [thread:$0]  %s46, 1024, %s48, [#allocation10], 64, 64, 4
    $region25: #{model_forward.1} parent=1 // pred_fallthru
      _
    // Predicated region
    $region26: #{model_forward.1} parent=1 // pred_check
      _
    $region27: #{model_forward.1} parent=1 // pred_check_branch
      %55 = sbr.rel (0) target = $region29
    $region28: #{model_forward.1} parent=1 // pred_region
      %57 = vsyncadd [#allocation10], 0
      %s58 = sshll.u32 %s8, 4
      %s59 = int_to_ptr.hbm [resolvable:$true] %s58
      %s60 = sshll.u32 [#allocation11], 4
      %s61 = int_to_ptr.vmem [resolvable:$true] %s60
      %66 = dma.hbm_to_vmem [thread:$0]  %s59, 1024, %s61, [#allocation10], 64, 64, 4
    $region29: #{model_forward.1} parent=1 // pred_fallthru
      _
    // Predicated region
    $region30: #{model_forward.1} parent=1 // pred_check
      _
    $region31: #{model_forward.1} parent=1 // pred_check_branch
      %68 = sbr.rel (0) target = $region33
    $region32: #{model_forward.1} parent=1 // pred_region
      %70 = vsyncadd [#allocation13], 0
      %s71 = sshll.u32 %s10, 4
      %s72 = int_to_ptr.hbm [resolvable:$true] %s71
      %s73 = sshll.u32 [#allocation12], 4
      %s74 = int_to_ptr.vmem [resolvable:$true] %s73
      %79 = dma.hbm_to_vmem [thread:$0]  %s72, 1024, %s74, [#allocation13], 64, 64, 4
    $region33: #{model_forward.1} parent=1 // pred_fallthru
      _
    // Predicated region
    $region34: #{model_forward.1} parent=1 // pred_check
      _
    $region35: #{model_forward.1} parent=1 // pred_check_branch
      %81 = sbr.rel (0) target = $region37
    $region36: #{model_forward.1} parent=1 // pred_region
      %83 = dma.done [#allocation7], 1024
    $region37: #{model_forward.1} parent=1 // pred_fallthru
      _
    // Predicated region
    $region38: #{model_forward.1} parent=1 // pred_check
      _
    $region39: #{model_forward.1} parent=1 // pred_check_branch
      %85 = sbr.rel (0) target = $region41
    $region40: #{model_forward.1} parent=1 // pred_region
      %87 = dma.done [#allocation10], 1024
    $region41: #{model_forward.1} parent=1 // pred_fallthru
      _
    // Predicated region
    $region42: #{model_forward.1} parent=1 // pred_check
      _
    $region43: #{model_forward.1} parent=1 // pred_check_branch
      %89 = sbr.rel (0) target = $region45
    $region44: #{model_forward.1} parent=1 // pred_region
      %91 = dma.done [#allocation10], 1024
    $region45: #{model_forward.1} parent=1 // pred_fallthru
      _
    // Predicated region
    $region46: #{model_forward.1} parent=1 // pred_check
      _
    $region47: #{model_forward.1} parent=1 // pred_check_branch
      %93 = sbr.rel (0) target = $region49
    $region48: #{model_forward.1} parent=1 // pred_region
      %95 = dma.done [#allocation13], 1024
    $region49: #{model_forward.1} parent=1 // pred_fallthru
      _
    // Predicated region
    $region50: #{model_forward.1} parent=1 // pred_check
      _
    $region51: #{model_forward.1} parent=1 // pred_check_branch
      %97 = sbr.rel target = $region53
    $region52: #{model_forward.1} parent=1 // pred_region
      %98 = sst [smem:[#allocation17]] [#allocation16]
      %99 = sst [smem:[#allocation18]] [#allocation15]
    $region53: #{model_forward.1} parent=1 // pred_fallthru
      _
    %101 = shalt.err (0)
    %s103 = sshll.u32 %s6, 4
    %s104 = int_to_ptr.hbm [resolvable:$true] %s103
    %s105 = sshll.u32 [#allocation2], 4
    %s106 = int_to_ptr.vmem [resolvable:$true] %s105
    %108 = dma.hbm_to_vmem [thread:$0]  %s104, 2048, %s106, [#allocation5]
    %s109 = scalar_lea.sflag [#allocation5], 1
    // Predicated region
    $region54: #{model_forward.1} parent=1 // pred_check
      _
    $region55: #{model_forward.1} parent=1 // pred_check_branch
      %111 = sbr.rel target = $region57
    $region56: #{model_forward.1} parent=1 // pred_region
      %112 = sst [smem:[#allocation17]] [#allocation20]
      %113 = sst [smem:[#allocation18]] [#allocation19]
    $region57: #{model_forward.1} parent=1 // pred_fallthru
      _
    %115 = shalt.err (0)
    %s117 = sshll.u32 %s7, 4
    %s118 = int_to_ptr.hbm [resolvable:$true] %s117
    %s119 = sshll.u32 [#allocation3], 4
    %s120 = int_to_ptr.vmem [resolvable:$true] %s119
    %122 = dma.hbm_to_vmem [thread:$0]  %s118, 2048, %s120, %s109
    %s123 = scalar_lea.sflag [#allocation5], 2
    // Predicated region
    $region58: #{model_forward.1} parent=1 // pred_check
      _
    $region59: #{model_forward.1} parent=1 // pred_check_branch
      %125 = sbr.rel target = $region61
    $region60: #{model_forward.1} parent=1 // pred_region
      %126 = sst [smem:[#allocation17]] [#allocation22]
      %127 = sst [smem:[#allocation18]] [#allocation21]
    $region61: #{model_forward.1} parent=1 // pred_fallthru
      _
    %129 = shalt.err (0)
    %s131 = sshll.u32 %s9, 4
    %s132 = int_to_ptr.hbm [resolvable:$true] %s131
    %s133 = sshll.u32 [#allocation4], 4
    %s134 = int_to_ptr.vmem [resolvable:$true] %s133
    %136 = dma.hbm_to_vmem [thread:$0]  %s132, 2048, %s134, %s123
    %v137 = vld [vmem:[%s2] sm:$0xff]
    %v138 = vld [vmem:[%s2 + $0x8] sm:$0xff]
    %v139 = vld [vmem:[%s2 + $0x10] sm:$0xff]
    %v140 = vperm.slane %v137, 0
    %v141 = vperm.slane %v137, 1
    %v142 = vperm.slane %v137, 2
    %v143 = vperm.slane %v137, 3
    %v144 = vperm.slane %v137, 4
    %v145 = vld [vmem:[%s3] sm:$0xf]
    %v146 = vld [vmem:[%s3 + $0x4] sm:$0xf]
    %v147 = vld [vmem:[%s3 + $0x8] sm:$0xf]
    %v148 = vld [vmem:[%s3 + $0xc] sm:$0xf]
    %v149 = vld [vmem:[%s3 + $0x10] sm:$0xf]
    %v150 = vld [vmem:[%s3 + $0x14] sm:$0xf]
    %v151 = vld [vmem:[%s3 + $0x18] sm:$0xf]
    %v152 = vld [vmem:[%s3 + $0x1c] sm:$0xf]
    %v153 = vld [vmem:[%s3 + $0x20] sm:$0xf]
    %v154 = vld [vmem:[%s3 + $0x24] sm:$0xf]
    %v155 = vld [vmem:[%s3 + $0x28] sm:$0xf]
    %v156 = vld [vmem:[%s3 + $0x2c] sm:$0xf]
    %v157 = vld [vmem:[%s3 + $0x30] sm:$0xf]
    %v158 = vld [vmem:[%s3 + $0x34] sm:$0xf]
    %v159 = vld [vmem:[%s3 + $0x38] sm:$0xf]
    %v160 = vld [vmem:[%s3 + $0x3c] sm:$0xf]
    %v161 = vld [vmem:[#allocation6] sm:$0xf]
    %v162 = vld [vmem:[#allocation6 + $0x4] sm:$0xf]
    %v163 = vld [vmem:[#allocation6 + $0x8] sm:$0xf]
    %v164 = vld [vmem:[#allocation6 + $0xc] sm:$0xf]
    %v165 = vld [vmem:[#allocation6 + $0x10] sm:$0xf]
    %v166 = vld [vmem:[#allocation6 + $0x14] sm:$0xf]
    %v167 = vld [vmem:[#allocation6 + $0x18] sm:$0xf]
    %v168 = vld [vmem:[#allocation6 + $0x1c] sm:$0xf]
    %v169 = vld [vmem:[#allocation6 + $0x20] sm:$0xf]
    %v170 = vld [vmem:[#allocation6 + $0x24] sm:$0xf]
    %v171 = vld [vmem:[#allocation6 + $0x28] sm:$0xf]
    %v172 = vld [vmem:[#allocation6 + $0x2c] sm:$0xf]
    %v173 = vld [vmem:[#allocation6 + $0x30] sm:$0xf]
    %v174 = vld [vmem:[#allocation6 + $0x34] sm:$0xf]
    %v175 = vld [vmem:[#allocation6 + $0x38] sm:$0xf]
    %v176 = vld [vmem:[#allocation6 + $0x3c] sm:$0xf]
    %v177 = vld [vmem:[#allocation9] sm:$0xf]
    %v178 = vld [vmem:[#allocation9 + $0x4] sm:$0xf]
    %v179 = vld [vmem:[#allocation9 + $0x8] sm:$0xf]
    %v180 = vld [vmem:[#allocation9 + $0xc] sm:$0xf]
    %v181 = vld [vmem:[#allocation9 + $0x10] sm:$0xf]
    %v182 = vld [vmem:[#allocation9 + $0x14] sm:$0xf]
    %v183 = vld [vmem:[#allocation9 + $0x18] sm:$0xf]
    %v184 = vld [vmem:[#allocation9 + $0x1c] sm:$0xf]
    %v185 = vld [vmem:[#allocation9 + $0x20] sm:$0xf]
    %v186 = vld [vmem:[#allocation9 + $0x24] sm:$0xf]
    %v187 = vld [vmem:[#allocation9 + $0x28] sm:$0xf]
    %v188 = vld [vmem:[#allocation9 + $0x2c] sm:$0xf]
    %v189 = vld [vmem:[#allocation9 + $0x30] sm:$0xf]
    %v190 = vld [vmem:[#allocation9 + $0x34] sm:$0xf]
    %v191 = vld [vmem:[#allocation9 + $0x38] sm:$0xf]
    %v192 = vld [vmem:[#allocation9 + $0x3c] sm:$0xf]
    %v193 = vld [vmem:[%s0] sm:$0xff]
    %v194 = vld [vmem:[%s1] sm:$0xff]
    %v195 = vpack.c.bf16 %v194, %v194
    %v212 = vunpack.c.l.b16 %v145
    %v213 = vunpack.c.l.b16 %v146
    %v214 = vunpack.c.l.b16 %v147
    %v215 = vunpack.c.l.b16 %v148
    %v216 = vunpack.c.l.b16 %v149
    %v217 = vunpack.c.l.b16 %v150
    %v218 = vunpack.c.l.b16 %v151
    %v219 = vunpack.c.l.b16 %v152
    %v220 = vunpack.c.l.b16 %v153
    %v221 = vunpack.c.l.b16 %v154
    %v222 = vunpack.c.l.b16 %v155
    %v223 = vunpack.c.l.b16 %v156
    %v224 = vunpack.c.l.b16 %v157
    %v225 = vunpack.c.l.b16 %v158
    %v226 = vunpack.c.l.b16 %v159
    %v227 = vunpack.c.l.b16 %v160
    %v228 = vpack.c.b16 %v213, %v212
    %v229 = vpack.c.b16 %v215, %v214
    %v230 = vpack.c.b16 %v217, %v216
    %v231 = vpack.c.b16 %v219, %v218
    %v232 = vpack.c.b16 %v221, %v220
    %v233 = vpack.c.b16 %v223, %v222
    %v234 = vpack.c.b16 %v225, %v224
    %v235 = vpack.c.b16 %v227, %v226
    %244 = vmatpush.bf16.msra.mxu0 %v235
    %245 = vmatpush.bf16.msra.mxu0 %v234
    %246 = vmatpush.bf16.msra.mxu0 %v233
    %247 = vmatpush.bf16.msra.mxu0 %v232
    %248 = vmatpush.bf16.msra.mxu0 %v231
    %249 = vmatpush.bf16.msra.mxu0 %v230
    %250 = vmatpush.bf16.msra.mxu0 %v229
    %251 = vmatpush.bf16.msra.mxu0 %v228
    %252 = vmatmul.bf16.gmra.mxu0 %v195
    %v253 = vpop.f32.mrf.mxu0
    %v254 = vadd.f32 %v140, %v253
    %v255 = vpop.f32.mrf.mxu0
    %256 = vdwg.mxu0
    %v257 = vpack.c.bf16 %v254, %v254
    %v274 = vunpack.c.l.b16 %v161
    %v275 = vunpack.c.l.b16 %v162
    %v276 = vunpack.c.l.b16 %v163
    %v277 = vunpack.c.l.b16 %v164
    %v278 = vunpack.c.l.b16 %v165
    %v279 = vunpack.c.l.b16 %v166
    %v280 = vunpack.c.l.b16 %v167
    %v281 = vunpack.c.l.b16 %v168
    %v282 = vunpack.c.l.b16 %v169
    %v283 = vunpack.c.l.b16 %v170
    %v284 = vunpack.c.l.b16 %v171
    %v285 = vunpack.c.l.b16 %v172
    %v286 = vunpack.c.l.b16 %v173
    %v287 = vunpack.c.l.b16 %v174
    %v288 = vunpack.c.l.b16 %v175
    %v289 = vunpack.c.l.b16 %v176
    %v290 = vpack.c.b16 %v275, %v274
    %v291 = vpack.c.b16 %v277, %v276
    %v292 = vpack.c.b16 %v279, %v278
    %v293 = vpack.c.b16 %v281, %v280
    %v294 = vpack.c.b16 %v283, %v282
    %v295 = vpack.c.b16 %v285, %v284
    %v296 = vpack.c.b16 %v287, %v286
    %v297 = vpack.c.b16 %v289, %v288
    %306 = vmatpush.bf16.msra.mxu0 %v297
    %307 = vmatpush.bf16.msra.mxu0 %v296
    %308 = vmatpush.bf16.msra.mxu0 %v295
    %309 = vmatpush.bf16.msra.mxu0 %v294
    %310 = vmatpush.bf16.msra.mxu0 %v293
    %311 = vmatpush.bf16.msra.mxu0 %v292
    %312 = vmatpush.bf16.msra.mxu0 %v291
    %313 = vmatpush.bf16.msra.mxu0 %v290
    %314 = vmatmul.bf16.gmra.mxu0 %v257
    %v315 = vpop.f32.mrf.mxu0
    %v316 = vadd.f32 %v141, %v315
    %v317 = vpop.f32.mrf.mxu0
    %318 = vdwg.mxu0
    %v319 = vadd.f32 %v193, %v316
    %320 = vadd.xlane.f32.xlu0 %v319
    %v321 = vpop.xlane.xlu0 %320
    %v322 = vmul.f32 %v321, 0.0078125
    %v323 = vsub.f32 %v319, %v322
    %v324 = vmul.f32 %v323, %v323
    %325 = vadd.xlane.f32.xlu0 %v324
    %v326 = vpop.xlane.xlu0 %325
    %v327 = vmul.f32 %v326, 0.0078125
    %v328 = vadd.f32 %v327, 1e-05
    %v329 = vrsqrt.pop %v328
    %v330 = vmul.f32 %v329, %v328
    %v331 = vmul.f32 %v330, %v329
    %v332 = vmul.f32 0.5, %v331
    %v333 = vsub.f32 1.5, %v332
    %v334 = vmul.f32 %v329, %v333
    %vm335 = vweird.f32 %v328
    %vm336 = vweird.f32 %v329
    %vm337 = vmor %vm335, %vm336
    %v338 = vsel %vm337, %v329, %v334
    %v339 = vmul.f32 %v323, %v338
    %v340 = vmul.f32 %v339, %v142
    %v341 = vadd.f32 %v340, %v143
    %v342 = vmul.f32 %v341, 0.5
    %v343 = vmul.f32 %v341, 0.70710677
    %v344 = vmul.f32 %v343, %v343
    %v345 = vmin.f32 16.0, %v344
    %v346 = vmul.f32 %v345, 2.1237322e-06
    %v347 = vadd.f32 %v346, 0.00028619796
    %v348 = vmul.f32 %v345, %v347
    %v349 = vadd.f32 %v348, 0.0036580483
    %v350 = vmul.f32 %v345, %v349
    %v351 = vadd.f32 %v350, 0.05243302
    %v352 = vmul.f32 %v345, %v351
    %v353 = vadd.f32 %v352, 0.18741608
    %v354 = vmul.f32 %v345, %v353
    %v355 = vadd.f32 %v354, 1.1283791
    %v356 = vmul.f32 %v343, %v355
    %v357 = vmul.f32 %v345, 3.8918573e-05
    %v358 = vadd.f32 %v357, 0.001143296
    %v359 = vmul.f32 %v345, %v358
    %v360 = vadd.f32 %v359, 0.014752088
    %v361 = vmul.f32 %v345, %v360
    %v362 = vadd.f32 %v361, 0.112945676
    %v363 = vmul.f32 %v345, %v362
    %v364 = vadd.f32 %v363, 0.4994258
    %v365 = vmul.f32 %v345, %v364
    %v366 = vadd.f32 %v365, 1.0
    %v367 = vrcp.pop %v366
    %v368 = vmul.f32 %v366, %v367
    %v369 = vsub.f32 1.0, %v368
    %v370 = vmul.f32 %v367, %v369
    %v371 = vadd.f32 %v367, %v370
    %vm372 = vweird.f32 %v366
    %vm373 = vweird.f32 %v367
    %vm374 = vmor %vm372, %vm373
    %v375 = vsel %vm374, %v367, %v371
    %v376 = vand.u32 2147483647, %v366
    %vm377 = vcmp.eq.f32.partialorder %v376, 8.507059e+37
    %v378 = vand.u32 %v366, 2147483648
    %v379 = vor.u32 1.1754944e-38, %v378
    %v380 = vsel %vm377, %v379, %v375
    %v381 = vmul.f32 %v356, %v380
    %v382 = vmin.f32 %v381, 1.0
    %v383 = vmax.f32 %v382, -1.0
    %v384 = vadd.f32 %v383, 1.0
    %v385 = vmul.f32 %v342, %v384
    %v386 = vpack.c.bf16 %v385, %v385
    %v403 = vunpack.c.l.b16 %v177
    %v404 = vunpack.c.l.b16 %v178
    %v405 = vunpack.c.l.b16 %v179
    %v406 = vunpack.c.l.b16 %v180
    %v407 = vunpack.c.l.b16 %v181
    %v408 = vunpack.c.l.b16 %v182
    %v409 = vunpack.c.l.b16 %v183
    %v410 = vunpack.c.l.b16 %v184
    %v411 = vunpack.c.l.b16 %v185
    %v412 = vunpack.c.l.b16 %v186
    %v413 = vunpack.c.l.b16 %v187
    %v414 = vunpack.c.l.b16 %v188
    %v415 = vunpack.c.l.b16 %v189
    %v416 = vunpack.c.l.b16 %v190
    %v417 = vunpack.c.l.b16 %v191
    %v418 = vunpack.c.l.b16 %v192
    %v419 = vpack.c.b16 %v404, %v403
    %v420 = vpack.c.b16 %v406, %v405
    %v421 = vpack.c.b16 %v408, %v407
    %v422 = vpack.c.b16 %v410, %v409
    %v423 = vpack.c.b16 %v412, %v411
    %v424 = vpack.c.b16 %v414, %v413
    %v425 = vpack.c.b16 %v416, %v415
    %v426 = vpack.c.b16 %v418, %v417
    %435 = vmatpush.bf16.msra.mxu0 %v426
    %436 = vmatpush.bf16.msra.mxu0 %v425
    %437 = vmatpush.bf16.msra.mxu0 %v424
    %438 = vmatpush.bf16.msra.mxu0 %v423
    %439 = vmatpush.bf16.msra.mxu0 %v422
    %440 = vmatpush.bf16.msra.mxu0 %v421
    %441 = vmatpush.bf16.msra.mxu0 %v420
    %442 = vmatpush.bf16.msra.mxu0 %v419
    %443 = vmatmul.bf16.gmra.mxu0 %v386
    %v444 = vpop.f32.mrf.mxu0
    %v445 = vadd.f32 %v144, %v444
    %v446 = vpop.f32.mrf.mxu0
    %447 = vdwg.mxu0
    %v448 = vpack.c.bf16 %v445, %v445
    %449 = vmatpush.bf16.msra.mxu0 %v235
    %450 = vmatpush.bf16.msra.mxu0 %v234
    %451 = vmatpush.bf16.msra.mxu0 %v233
    %452 = vmatpush.bf16.msra.mxu0 %v232
    %453 = vmatpush.bf16.msra.mxu0 %v231
    %454 = vmatpush.bf16.msra.mxu0 %v230
    %455 = vmatpush.bf16.msra.mxu0 %v229
    %456 = vmatpush.bf16.msra.mxu0 %v228
    %457 = vmatmul.bf16.gmra.mxu0 %v448
    %v458 = vpop.f32.mrf.mxu0
    %v459 = vadd.f32 %v140, %v458
    %v460 = vpop.f32.mrf.mxu0
    %461 = vdwg.mxu0
    %v462 = vpack.c.bf16 %v459, %v459
    %463 = vmatpush.bf16.msra.mxu0 %v297
    %464 = vmatpush.bf16.msra.mxu0 %v296
    %465 = vmatpush.bf16.msra.mxu0 %v295
    %466 = vmatpush.bf16.msra.mxu0 %v294
    %467 = vmatpush.bf16.msra.mxu0 %v293
    %468 = vmatpush.bf16.msra.mxu0 %v292
    %469 = vmatpush.bf16.msra.mxu0 %v291
    %470 = vmatpush.bf16.msra.mxu0 %v290
    %471 = vmatmul.bf16.gmra.mxu0 %v462
    %v472 = vpop.f32.mrf.mxu0
    %v473 = vadd.f32 %v141, %v472
    %v474 = vpop.f32.mrf.mxu0
    %475 = vdwg.mxu0
    %v476 = vadd.f32 %v194, %v473
    %477 = vadd.xlane.f32.xlu0 %v476
    %v478 = vpop.xlane.xlu0 %477
    %v479 = vmul.f32 %v478, 0.0078125
    %v480 = vsub.f32 %v476, %v479
    %v481 = vmul.f32 %v480, %v480
    %482 = vadd.xlane.f32.xlu0 %v481
    %v483 = vpop.xlane.xlu0 %482
    %v484 = vmul.f32 %v483, 0.0078125
    %v485 = vadd.f32 %v484, 1e-05
    %v486 = vrsqrt.pop %v485
    %v487 = vmul.f32 %v486, %v485
    %v488 = vmul.f32 %v487, %v486
    %v489 = vmul.f32 0.5, %v488
    %v490 = vsub.f32 1.5, %v489
    %v491 = vmul.f32 %v486, %v490
    %vm492 = vweird.f32 %v485
    %vm493 = vweird.f32 %v486
    %vm494 = vmor %vm492, %vm493
    %v495 = vsel %vm494, %v486, %v491
    %v496 = vmul.f32 %v480, %v495
    %v497 = vmul.f32 %v496, %v142
    %v498 = vadd.f32 %v497, %v143
    %v499 = vmul.f32 %v498, 0.5
    %v500 = vmul.f32 %v498, 0.70710677
    %v501 = vmul.f32 %v500, %v500
    %v502 = vmin.f32 16.0, %v501
    %v503 = vmul.f32 %v502, 2.1237322e-06
    %v504 = vadd.f32 %v503, 0.00028619796
    %v505 = vmul.f32 %v502, %v504
    %v506 = vadd.f32 %v505, 0.0036580483
    %v507 = vmul.f32 %v502, %v506
    %v508 = vadd.f32 %v507, 0.05243302
    %v509 = vmul.f32 %v502, %v508
    %v510 = vadd.f32 %v509, 0.18741608
    %v511 = vmul.f32 %v502, %v510
    %v512 = vadd.f32 %v511, 1.1283791
    %v513 = vmul.f32 %v500, %v512
    %v514 = vmul.f32 %v502, 3.8918573e-05
    %v515 = vadd.f32 %v514, 0.001143296
    %v516 = vmul.f32 %v502, %v515
    %v517 = vadd.f32 %v516, 0.014752088
    %v518 = vmul.f32 %v502, %v517
    %v519 = vadd.f32 %v518, 0.112945676
    %v520 = vmul.f32 %v502, %v519
    %v521 = vadd.f32 %v520, 0.4994258
    %v522 = vmul.f32 %v502, %v521
    %v523 = vadd.f32 %v522, 1.0
    %v524 = vrcp.pop %v523
    %v525 = vmul.f32 %v523, %v524
    %v526 = vsub.f32 1.0, %v525
    %v527 = vmul.f32 %v524, %v526
    %v528 = vadd.f32 %v524, %v527
    %vm529 = vweird.f32 %v523
    %vm530 = vweird.f32 %v524
    %vm531 = vmor %vm529, %vm530
    %v532 = vsel %vm531, %v524, %v528
    %v533 = vand.u32 2147483647, %v523
    %vm534 = vcmp.eq.f32.partialorder %v533, 8.507059e+37
    %v535 = vand.u32 %v523, 2147483648
    %v536 = vor.u32 1.1754944e-38, %v535
    %v537 = vsel %vm534, %v536, %v532
    %v538 = vmul.f32 %v513, %v537
    %v539 = vmin.f32 %v538, 1.0
    %v540 = vmax.f32 %v539, -1.0
    %v541 = vadd.f32 %v540, 1.0
    %v542 = vmul.f32 %v499, %v541
    %v543 = vpack.c.bf16 %v542, %v542
    %544 = vmatpush.bf16.msra.mxu0 %v426
    %545 = vmatpush.bf16.msra.mxu0 %v425
    %546 = vmatpush.bf16.msra.mxu0 %v424
    %547 = vmatpush.bf16.msra.mxu0 %v423
    %548 = vmatpush.bf16.msra.mxu0 %v422
    %549 = vmatpush.bf16.msra.mxu0 %v421
    %550 = vmatpush.bf16.msra.mxu0 %v420
    %551 = vmatpush.bf16.msra.mxu0 %v419
    %552 = vmatmul.bf16.gmra.mxu0 %v543
    %v553 = vpop.f32.mrf.mxu0
    %v554 = vadd.f32 %v144, %v553
    %v555 = vpop.f32.mrf.mxu0
    %556 = vdwg.mxu0
    %s557 = smul.u32 4, 16
    %s558 = smul.u32 %s557, 2
    %s559 = sshll.u32 %s558, 4
    %560 = dma.done [#allocation5], %s559
    %v561 = vld [vmem:[#allocation2] sm:$0xff]
    %v562 = vld [vmem:[#allocation2 + $0x8] sm:$0xff]
    %v563 = vld [vmem:[#allocation2 + $0x10] sm:$0xff]
    %v564 = vld [vmem:[#allocation2 + $0x18] sm:$0xff]
    %v565 = vld [vmem:[#allocation2 + $0x20] sm:$0xff]
    %v566 = vld [vmem:[#allocation2 + $0x28] sm:$0xff]
    %v567 = vld [vmem:[#allocation2 + $0x30] sm:$0xff]
    %v568 = vld [vmem:[#allocation2 + $0x38] sm:$0xff]
    %v569 = vld [vmem:[#allocation2 + $0x40] sm:$0xff]
    %v570 = vld [vmem:[#allocation2 + $0x48] sm:$0xff]
    %v571 = vld [vmem:[#allocation2 + $0x50] sm:$0xff]
    %v572 = vld [vmem:[#allocation2 + $0x58] sm:$0xff]
    %v573 = vld [vmem:[#allocation2 + $0x60] sm:$0xff]
    %v574 = vld [vmem:[#allocation2 + $0x68] sm:$0xff]
    %v575 = vld [vmem:[#allocation2 + $0x70] sm:$0xff]
    %v576 = vld [vmem:[#allocation2 + $0x78] sm:$0xff]
    %v577 = vperm.slane %v137, 5
    %v578 = vperm.slane %v138, 5
    %v595 = vunpack.c.l.b16 %v561
    %v596 = vunpack.c.h.b16 %v561
    %v597 = vunpack.c.l.b16 %v562
    %v598 = vunpack.c.h.b16 %v562
    %v599 = vunpack.c.l.b16 %v563
    %v600 = vunpack.c.h.b16 %v563
    %v601 = vunpack.c.l.b16 %v564
    %v602 = vunpack.c.h.b16 %v564
    %v603 = vunpack.c.l.b16 %v565
    %v604 = vunpack.c.h.b16 %v565
    %v605 = vunpack.c.l.b16 %v566
    %v606 = vunpack.c.h.b16 %v566
    %v607 = vunpack.c.l.b16 %v567
    %v608 = vunpack.c.h.b16 %v567
    %v609 = vunpack.c.l.b16 %v568
    %v610 = vunpack.c.h.b16 %v568
    %v611 = vunpack.c.l.b16 %v569
    %v612 = vunpack.c.h.b16 %v569
    %v613 = vunpack.c.l.b16 %v570
    %v614 = vunpack.c.h.b16 %v570
    %v615 = vunpack.c.l.b16 %v571
    %v616 = vunpack.c.h.b16 %v571
    %v617 = vunpack.c.l.b16 %v572
    %v618 = vunpack.c.h.b16 %v572
    %v619 = vunpack.c.l.b16 %v573
    %v620 = vunpack.c.h.b16 %v573
    %v621 = vunpack.c.l.b16 %v574
    %v622 = vunpack.c.h.b16 %v574
    %v623 = vunpack.c.l.b16 %v575
    %v624 = vunpack.c.h.b16 %v575
    %v625 = vunpack.c.l.b16 %v576
    %v626 = vunpack.c.h.b16 %v576
    %v627 = vpack.c.b16 %v597, %v595
    %v628 = vpack.c.b16 %v598, %v596
    %v629 = vpack.c.b16 %v601, %v599
    %v630 = vpack.c.b16 %v602, %v600
    %v631 = vpack.c.b16 %v605, %v603
    %v632 = vpack.c.b16 %v606, %v604
    %v633 = vpack.c.b16 %v609, %v607
    %v634 = vpack.c.b16 %v610, %v608
    %v635 = vpack.c.b16 %v613, %v611
    %v636 = vpack.c.b16 %v614, %v612
    %v637 = vpack.c.b16 %v617, %v615
    %v638 = vpack.c.b16 %v618, %v616
    %v639 = vpack.c.b16 %v621, %v619
    %v640 = vpack.c.b16 %v622, %v620
    %v641 = vpack.c.b16 %v625, %v623
    %v642 = vpack.c.b16 %v626, %v624
    %659 = vmatpush.bf16.msra.mxu0 %v641
    %660 = vmatpush.bf16.msra.mxu0 %v639
    %661 = vmatpush.bf16.msra.mxu0 %v637
    %662 = vmatpush.bf16.msra.mxu0 %v635
    %663 = vmatpush.bf16.msra.mxu0 %v633
    %664 = vmatpush.bf16.msra.mxu0 %v631
    %665 = vmatpush.bf16.msra.mxu0 %v629
    %666 = vmatpush.bf16.msra.mxu0 %v627
    %667 = vmatmul.bf16.gmra.mxu0 %v448
    %v668 = vpop.f32.mrf.mxu0
    %v669 = vadd.f32 %v577, %v668
    %v670 = vpop.f32.mrf.mxu0
    %671 = vdwg.mxu0
    %672 = vmatpush.bf16.msra.mxu0 %v642
    %673 = vmatpush.bf16.msra.mxu0 %v640
    %674 = vmatpush.bf16.msra.mxu0 %v638
    %675 = vmatpush.bf16.msra.mxu0 %v636
    %676 = vmatpush.bf16.msra.mxu0 %v634
    %677 = vmatpush.bf16.msra.mxu0 %v632
    %678 = vmatpush.bf16.msra.mxu0 %v630
    %679 = vmatpush.bf16.msra.mxu0 %v628
    %680 = vmatmul.bf16.gmra.mxu0 %v448
    %v681 = vpop.f32.mrf.mxu0
    %v682 = vadd.f32 %v578, %v681
    %v683 = vpop.f32.mrf.mxu0
    %684 = vdwg.mxu0
    %v685 = vmax.f32 %v669, 0.0
    %v686 = vmax.f32 %v682, 0.0
    %v687 = vpack.c.bf16 %v554, %v554
    %688 = vmatpush.bf16.msra.mxu0 %v641
    %689 = vmatpush.bf16.msra.mxu0 %v639
    %690 = vmatpush.bf16.msra.mxu0 %v637
    %691 = vmatpush.bf16.msra.mxu0 %v635
    %692 = vmatpush.bf16.msra.mxu0 %v633
    %693 = vmatpush.bf16.msra.mxu0 %v631
    %694 = vmatpush.bf16.msra.mxu0 %v629
    %695 = vmatpush.bf16.msra.mxu0 %v627
    %696 = vmatmul.bf16.gmra.mxu0 %v687
    %v697 = vpop.f32.mrf.mxu0
    %v698 = vadd.f32 %v577, %v697
    %v699 = vpop.f32.mrf.mxu0
    %700 = vdwg.mxu0
    %701 = vmatpush.bf16.msra.mxu0 %v642
    %702 = vmatpush.bf16.msra.mxu0 %v640
    %703 = vmatpush.bf16.msra.mxu0 %v638
    %704 = vmatpush.bf16.msra.mxu0 %v636
    %705 = vmatpush.bf16.msra.mxu0 %v634
    %706 = vmatpush.bf16.msra.mxu0 %v632
    %707 = vmatpush.bf16.msra.mxu0 %v630
    %708 = vmatpush.bf16.msra.mxu0 %v628
    %709 = vmatmul.bf16.gmra.mxu0 %v687
    %v710 = vpop.f32.mrf.mxu0
    %v711 = vadd.f32 %v578, %v710
    %v712 = vpop.f32.mrf.mxu0
    %713 = vdwg.mxu0
    %v714 = vmax.f32 %v698, 0.0
    %v715 = vmax.f32 %v711, 0.0
    %s716 = smul.u32 4, 32
    %s717 = smul.u32 %s716, 1
    %s718 = sshll.u32 %s717, 4
    %719 = dma.done %s109, %s718
    %s720 = sshll.u32 %s717, 4
    %721 = dma.done %s123, %s720
    %v722 = vld [vmem:[#allocation3] sm:$0xf]
    %v723 = vld [vmem:[#allocation3 + $0x4] sm:$0xf]
    %v724 = vld [vmem:[#allocation3 + $0x8] sm:$0xf]
    %v725 = vld [vmem:[#allocation3 + $0xc] sm:$0xf]
    %v726 = vld [vmem:[#allocation3 + $0x10] sm:$0xf]
    %v727 = vld [vmem:[#allocation3 + $0x14] sm:$0xf]
    %v728 = vld [vmem:[#allocation3 + $0x18] sm:$0xf]
    %v729 = vld [vmem:[#allocation3 + $0x1c] sm:$0xf]
    %v730 = vld [vmem:[#allocation3 + $0x20] sm:$0xf]
    %v731 = vld [vmem:[#allocation3 + $0x24] sm:$0xf]
    %v732 = vld [vmem:[#allocation3 + $0x28] sm:$0xf]
    %v733 = vld [vmem:[#allocation3 + $0x2c] sm:$0xf]
    %v734 = vld [vmem:[#allocation3 + $0x30] sm:$0xf]
    %v735 = vld [vmem:[#allocation3 + $0x34] sm:$0xf]
    %v736 = vld [vmem:[#allocation3 + $0x38] sm:$0xf]
    %v737 = vld [vmem:[#allocation3 + $0x3c] sm:$0xf]
    %v738 = vld [vmem:[#allocation3 + $0x40] sm:$0xf]
    %v739 = vld [vmem:[#allocation3 + $0x44] sm:$0xf]
    %v740 = vld [vmem:[#allocation3 + $0x48] sm:$0xf]
    %v741 = vld [vmem:[#allocation3 + $0x4c] sm:$0xf]
    %v742 = vld [vmem:[#allocation3 + $0x50] sm:$0xf]
    %v743 = vld [vmem:[#allocation3 + $0x54] sm:$0xf]
    %v744 = vld [vmem:[#allocation3 + $0x58] sm:$0xf]
    %v745 = vld [vmem:[#allocation3 + $0x5c] sm:$0xf]
    %v746 = vld [vmem:[#allocation3 + $0x60] sm:$0xf]
    %v747 = vld [vmem:[#allocation3 + $0x64] sm:$0xf]
    %v748 = vld [vmem:[#allocation3 + $0x68] sm:$0xf]
    %v749 = vld [vmem:[#allocation3 + $0x6c] sm:$0xf]
    %v750 = vld [vmem:[#allocation3 + $0x70] sm:$0xf]
    %v751 = vld [vmem:[#allocation3 + $0x74] sm:$0xf]
    %v752 = vld [vmem:[#allocation3 + $0x78] sm:$0xf]
    %v753 = vld [vmem:[#allocation3 + $0x7c] sm:$0xf]
    %v754 = vld [vmem:[#allocation11] sm:$0xf]
    %v755 = vld [vmem:[#allocation11 + $0x4] sm:$0xf]
    %v756 = vld [vmem:[#allocation11 + $0x8] sm:$0xf]
    %v757 = vld [vmem:[#allocation11 + $0xc] sm:$0xf]
    %v758 = vld [vmem:[#allocation11 + $0x10] sm:$0xf]
    %v759 = vld [vmem:[#allocation11 + $0x14] sm:$0xf]
    %v760 = vld [vmem:[#allocation11 + $0x18] sm:$0xf]
    %v761 = vld [vmem:[#allocation11 + $0x1c] sm:$0xf]
    %v762 = vld [vmem:[#allocation11 + $0x20] sm:$0xf]
    %v763 = vld [vmem:[#allocation11 + $0x24] sm:$0xf]
    %v764 = vld [vmem:[#allocation11 + $0x28] sm:$0xf]
    %v765 = vld [vmem:[#allocation11 + $0x2c] sm:$0xf]
    %v766 = vld [vmem:[#allocation11 + $0x30] sm:$0xf]
    %v767 = vld [vmem:[#allocation11 + $0x34] sm:$0xf]
    %v768 = vld [vmem:[#allocation11 + $0x38] sm:$0xf]
    %v769 = vld [vmem:[#allocation11 + $0x3c] sm:$0xf]
    %v770 = vpack.c.bf16 %v685, %v685
    %v771 = vpack.c.bf16 %v686, %v686
    %v772 = vperm.slane %v137, 6
    %v805 = vunpack.c.l.b16 %v722
    %v806 = vunpack.c.l.b16 %v723
    %v807 = vunpack.c.l.b16 %v724
    %v808 = vunpack.c.l.b16 %v725
    %v809 = vunpack.c.l.b16 %v726
    %v810 = vunpack.c.l.b16 %v727
    %v811 = vunpack.c.l.b16 %v728
    %v812 = vunpack.c.l.b16 %v729
    %v813 = vunpack.c.l.b16 %v730
    %v814 = vunpack.c.l.b16 %v731
    %v815 = vunpack.c.l.b16 %v732
    %v816 = vunpack.c.l.b16 %v733
    %v817 = vunpack.c.l.b16 %v734
    %v818 = vunpack.c.l.b16 %v735
    %v819 = vunpack.c.l.b16 %v736
    %v820 = vunpack.c.l.b16 %v737
    %v821 = vunpack.c.l.b16 %v738
    %v822 = vunpack.c.l.b16 %v739
    %v823 = vunpack.c.l.b16 %v740
    %v824 = vunpack.c.l.b16 %v741
    %v825 = vunpack.c.l.b16 %v742
    %v826 = vunpack.c.l.b16 %v743
    %v827 = vunpack.c.l.b16 %v744
    %v828 = vunpack.c.l.b16 %v745
    %v829 = vunpack.c.l.b16 %v746
    %v830 = vunpack.c.l.b16 %v747
    %v831 = vunpack.c.l.b16 %v748
    %v832 = vunpack.c.l.b16 %v749
    %v833 = vunpack.c.l.b16 %v750
    %v834 = vunpack.c.l.b16 %v751
    %v835 = vunpack.c.l.b16 %v752
    %v836 = vunpack.c.l.b16 %v753
    %v837 = vpack.c.b16 %v806, %v805
    %v838 = vpack.c.b16 %v808, %v807
    %v839 = vpack.c.b16 %v810, %v809
    %v840 = vpack.c.b16 %v812, %v811
    %v841 = vpack.c.b16 %v814, %v813
    %v842 = vpack.c.b16 %v816, %v815
    %v843 = vpack.c.b16 %v818, %v817
    %v844 = vpack.c.b16 %v820, %v819
    %v845 = vpack.c.b16 %v822, %v821
    %v846 = vpack.c.b16 %v824, %v823
    %v847 = vpack.c.b16 %v826, %v825
    %v848 = vpack.c.b16 %v828, %v827
    %v849 = vpack.c.b16 %v830, %v829
    %v850 = vpack.c.b16 %v832, %v831
    %v851 = vpack.c.b16 %v834, %v833
    %v852 = vpack.c.b16 %v836, %v835
    %869 = vmatpush.bf16.msra.mxu0 %v844
    %870 = vmatpush.bf16.msra.mxu0 %v843
    %871 = vmatpush.bf16.msra.mxu0 %v842
    %872 = vmatpush.bf16.msra.mxu0 %v841
    %873 = vmatpush.bf16.msra.mxu0 %v840
    %874 = vmatpush.bf16.msra.mxu0 %v839
    %875 = vmatpush.bf16.msra.mxu0 %v838
    %876 = vmatpush.bf16.msra.mxu0 %v837
    %877 = vmatmul.bf16.gmra.mxu0 %v770
    %v878 = vpop.f32.mrf.mxu0
    %v879 = vadd.f32 %v772, %v878
    %v880 = vpop.f32.mrf.mxu0
    %881 = vdwg.mxu0
    %882 = vmatpush.bf16.msra.mxu0 %v852
    %883 = vmatpush.bf16.msra.mxu0 %v851
    %884 = vmatpush.bf16.msra.mxu0 %v850
    %885 = vmatpush.bf16.msra.mxu0 %v849
    %886 = vmatpush.bf16.msra.mxu0 %v848
    %887 = vmatpush.bf16.msra.mxu0 %v847
    %888 = vmatpush.bf16.msra.mxu0 %v846
    %889 = vmatpush.bf16.msra.mxu0 %v845
    %890 = vmatmul.bf16.gmra.mxu0 %v771
    %v891 = vpop.f32.mrf.mxu0
    %v892 = vadd.f32 %v879, %v891
    %v893 = vpop.f32.mrf.mxu0
    %894 = vdwg.mxu0
    %v895 = vmul.f32 %v892, 0.5
    %v896 = vmul.f32 %v892, 0.70710677
    %v897 = vmul.f32 %v896, %v896
    %v898 = vmin.f32 16.0, %v897
    %v899 = vmul.f32 %v898, 2.1237322e-06
    %v900 = vadd.f32 %v899, 0.00028619796
    %v901 = vmul.f32 %v898, %v900
    %v902 = vadd.f32 %v901, 0.0036580483
    %v903 = vmul.f32 %v898, %v902
    %v904 = vadd.f32 %v903, 0.05243302
    %v905 = vmul.f32 %v898, %v904
    %v906 = vadd.f32 %v905, 0.18741608
    %v907 = vmul.f32 %v898, %v906
    %v908 = vadd.f32 %v907, 1.1283791
    %v909 = vmul.f32 %v896, %v908
    %v910 = vmul.f32 %v898, 3.8918573e-05
    %v911 = vadd.f32 %v910, 0.001143296
    %v912 = vmul.f32 %v898, %v911
    %v913 = vadd.f32 %v912, 0.014752088
    %v914 = vmul.f32 %v898, %v913
    %v915 = vadd.f32 %v914, 0.112945676
    %v916 = vmul.f32 %v898, %v915
    %v917 = vadd.f32 %v916, 0.4994258
    %v918 = vmul.f32 %v898, %v917
    %v919 = vadd.f32 %v918, 1.0
    %v920 = vrcp.pop %v919
    %v921 = vmul.f32 %v919, %v920
    %v922 = vsub.f32 1.0, %v921
    %v923 = vmul.f32 %v920, %v922
    %v924 = vadd.f32 %v920, %v923
    %vm925 = vweird.f32 %v919
    %vm926 = vweird.f32 %v920
    %vm927 = vmor %vm925, %vm926
    %v928 = vsel %vm927, %v920, %v924
    %v929 = vand.u32 2147483647, %v919
    %vm930 = vcmp.eq.f32.partialorder %v929, 8.507059e+37
    %v931 = vand.u32 %v919, 2147483648
    %v932 = vor.u32 1.1754944e-38, %v931
    %v933 = vsel %vm930, %v932, %v928
    %v934 = vmul.f32 %v909, %v933
    %v935 = vmin.f32 %v934, 1.0
    %v936 = vmax.f32 %v935, -1.0
    %v937 = vadd.f32 %v936, 1.0
    %v938 = vmul.f32 %v895, %v937
    %v939 = vpack.c.bf16 %v938, %v938
    %v940 = vperm.slane %v137, 7
    %v957 = vunpack.c.l.b16 %v754
    %v958 = vunpack.c.l.b16 %v755
    %v959 = vunpack.c.l.b16 %v756
    %v960 = vunpack.c.l.b16 %v757
    %v961 = vunpack.c.l.b16 %v758
    %v962 = vunpack.c.l.b16 %v759
    %v963 = vunpack.c.l.b16 %v760
    %v964 = vunpack.c.l.b16 %v761
    %v965 = vunpack.c.l.b16 %v762
    %v966 = vunpack.c.l.b16 %v763
    %v967 = vunpack.c.l.b16 %v764
    %v968 = vunpack.c.l.b16 %v765
    %v969 = vunpack.c.l.b16 %v766
    %v970 = vunpack.c.l.b16 %v767
    %v971 = vunpack.c.l.b16 %v768
    %v972 = vunpack.c.l.b16 %v769
    %v973 = vpack.c.b16 %v958, %v957
    %v974 = vpack.c.b16 %v960, %v959
    %v975 = vpack.c.b16 %v962, %v961
    %v976 = vpack.c.b16 %v964, %v963
    %v977 = vpack.c.b16 %v966, %v965
    %v978 = vpack.c.b16 %v968, %v967
    %v979 = vpack.c.b16 %v970, %v969
    %v980 = vpack.c.b16 %v972, %v971
    %989 = vmatpush.bf16.msra.mxu0 %v980
    %990 = vmatpush.bf16.msra.mxu0 %v979
    %991 = vmatpush.bf16.msra.mxu0 %v978
    %992 = vmatpush.bf16.msra.mxu0 %v977
    %993 = vmatpush.bf16.msra.mxu0 %v976
    %994 = vmatpush.bf16.msra.mxu0 %v975
    %995 = vmatpush.bf16.msra.mxu0 %v974
    %996 = vmatpush.bf16.msra.mxu0 %v973
    %997 = vmatmul.bf16.gmra.mxu0 %v939
    %v998 = vpop.f32.mrf.mxu0
    %v999 = vadd.f32 %v940, %v998
    %v1000 = vpop.f32.mrf.mxu0
    %1001 = vdwg.mxu0
    %v1002 = vadd.f32 %v999, %v892
    %1003 = vadd.xlane.f32.xlu0 %v1002
    %v1004 = vpop.xlane.xlu0 %1003
    %v1005 = vmul.f32 %v1004, 0.0078125
    %v1006 = vsub.f32 %v1002, %v1005
    %v1007 = vmul.f32 %v1006, %v1006
    %1008 = vadd.xlane.f32.xlu0 %v1007
    %v1009 = vpop.xlane.xlu0 %1008
    %v1010 = vmul.f32 %v1009, 0.0078125
    %v1011 = vadd.f32 %v1010, 1e-05
    %v1012 = vrsqrt.pop %v1011
    %v1013 = vmul.f32 %v1012, %v1011
    %v1014 = vmul.f32 %v1013, %v1012
    %v1015 = vmul.f32 0.5, %v1014
    %v1016 = vsub.f32 1.5, %v1015
    %v1017 = vmul.f32 %v1012, %v1016
    %vm1018 = vweird.f32 %v1011
    %vm1019 = vweird.f32 %v1012
    %vm1020 = vmor %vm1018, %vm1019
    %v1021 = vsel %vm1020, %v1012, %v1017
    %v1022 = vmul.f32 %v1006, %v1021
    %v1023 = vperm.slane %v139, 0
    %v1024 = vmul.f32 %v1022, %v1023
    %v1025 = vperm.slane %v139, 1
    %v1026 = vadd.f32 %v1024, %v1025
    %v1027 = vld [vmem:[#allocation4] sm:$0xf]
    %v1028 = vld [vmem:[#allocation4 + $0x4] sm:$0xf]
    %v1029 = vld [vmem:[#allocation4 + $0x8] sm:$0xf]
    %v1030 = vld [vmem:[#allocation4 + $0xc] sm:$0xf]
    %v1031 = vld [vmem:[#allocation4 + $0x10] sm:$0xf]
    %v1032 = vld [vmem:[#allocation4 + $0x14] sm:$0xf]
    %v1033 = vld [vmem:[#allocation4 + $0x18] sm:$0xf]
    %v1034 = vld [vmem:[#allocation4 + $0x1c] sm:$0xf]
    %v1035 = vld [vmem:[#allocation4 + $0x20] sm:$0xf]
    %v1036 = vld [vmem:[#allocation4 + $0x24] sm:$0xf]
    %v1037 = vld [vmem:[#allocation4 + $0x28] sm:$0xf]
    %v1038 = vld [vmem:[#allocation4 + $0x2c] sm:$0xf]
    %v1039 = vld [vmem:[#allocation4 + $0x30] sm:$0xf]
    %v1040 = vld [vmem:[#allocation4 + $0x34] sm:$0xf]
    %v1041 = vld [vmem:[#allocation4 + $0x38] sm:$0xf]
    %v1042 = vld [vmem:[#allocation4 + $0x3c] sm:$0xf]
    %v1043 = vld [vmem:[#allocation4 + $0x40] sm:$0xf]
    %v1044 = vld [vmem:[#allocation4 + $0x44] sm:$0xf]
    %v1045 = vld [vmem:[#allocation4 + $0x48] sm:$0xf]
    %v1046 = vld [vmem:[#allocation4 + $0x4c] sm:$0xf]
    %v1047 = vld [vmem:[#allocation4 + $0x50] sm:$0xf]
    %v1048 = vld [vmem:[#allocation4 + $0x54] sm:$0xf]
    %v1049 = vld [vmem:[#allocation4 + $0x58] sm:$0xf]
    %v1050 = vld [vmem:[#allocation4 + $0x5c] sm:$0xf]
    %v1051 = vld [vmem:[#allocation4 + $0x60] sm:$0xf]
    %v1052 = vld [vmem:[#allocation4 + $0x64] sm:$0xf]
    %v1053 = vld [vmem:[#allocation4 + $0x68] sm:$0xf]
    %v1054 = vld [vmem:[#allocation4 + $0x6c] sm:$0xf]
    %v1055 = vld [vmem:[#allocation4 + $0x70] sm:$0xf]
    %v1056 = vld [vmem:[#allocation4 + $0x74] sm:$0xf]
    %v1057 = vld [vmem:[#allocation4 + $0x78] sm:$0xf]
    %v1058 = vld [vmem:[#allocation4 + $0x7c] sm:$0xf]
    %v1059 = vld [vmem:[#allocation12] sm:$0xf]
    %v1060 = vld [vmem:[#allocation12 + $0x4] sm:$0xf]
    %v1061 = vld [vmem:[#allocation12 + $0x8] sm:$0xf]
    %v1062 = vld [vmem:[#allocation12 + $0xc] sm:$0xf]
    %v1063 = vld [vmem:[#allocation12 + $0x10] sm:$0xf]
    %v1064 = vld [vmem:[#allocation12 + $0x14] sm:$0xf]
    %v1065 = vld [vmem:[#allocation12 + $0x18] sm:$0xf]
    %v1066 = vld [vmem:[#allocation12 + $0x1c] sm:$0xf]
    %v1067 = vld [vmem:[#allocation12 + $0x20] sm:$0xf]
    %v1068 = vld [vmem:[#allocation12 + $0x24] sm:$0xf]
    %v1069 = vld [vmem:[#allocation12 + $0x28] sm:$0xf]
    %v1070 = vld [vmem:[#allocation12 + $0x2c] sm:$0xf]
    %v1071 = vld [vmem:[#allocation12 + $0x30] sm:$0xf]
    %v1072 = vld [vmem:[#allocation12 + $0x34] sm:$0xf]
    %v1073 = vld [vmem:[#allocation12 + $0x38] sm:$0xf]
    %v1074 = vld [vmem:[#allocation12 + $0x3c] sm:$0xf]
    %v1075 = vpack.c.bf16 %v714, %v714
    %v1076 = vpack.c.bf16 %v715, %v715
    %v1077 = vperm.slane %v139, 2
    %v1110 = vunpack.c.l.b16 %v1027
    %v1111 = vunpack.c.l.b16 %v1028
    %v1112 = vunpack.c.l.b16 %v1029
    %v1113 = vunpack.c.l.b16 %v1030
    %v1114 = vunpack.c.l.b16 %v1031
    %v1115 = vunpack.c.l.b16 %v1032
    %v1116 = vunpack.c.l.b16 %v1033
    %v1117 = vunpack.c.l.b16 %v1034
    %v1118 = vunpack.c.l.b16 %v1035
    %v1119 = vunpack.c.l.b16 %v1036
    %v1120 = vunpack.c.l.b16 %v1037
    %v1121 = vunpack.c.l.b16 %v1038
    %v1122 = vunpack.c.l.b16 %v1039
    %v1123 = vunpack.c.l.b16 %v1040
    %v1124 = vunpack.c.l.b16 %v1041
    %v1125 = vunpack.c.l.b16 %v1042
    %v1126 = vunpack.c.l.b16 %v1043
    %v1127 = vunpack.c.l.b16 %v1044
    %v1128 = vunpack.c.l.b16 %v1045
    %v1129 = vunpack.c.l.b16 %v1046
    %v1130 = vunpack.c.l.b16 %v1047
    %v1131 = vunpack.c.l.b16 %v1048
    %v1132 = vunpack.c.l.b16 %v1049
    %v1133 = vunpack.c.l.b16 %v1050
    %v1134 = vunpack.c.l.b16 %v1051
    %v1135 = vunpack.c.l.b16 %v1052
    %v1136 = vunpack.c.l.b16 %v1053
    %v1137 = vunpack.c.l.b16 %v1054
    %v1138 = vunpack.c.l.b16 %v1055
    %v1139 = vunpack.c.l.b16 %v1056
    %v1140 = vunpack.c.l.b16 %v1057
    %v1141 = vunpack.c.l.b16 %v1058
    %v1142 = vpack.c.b16 %v1111, %v1110
    %v1143 = vpack.c.b16 %v1113, %v1112
    %v1144 = vpack.c.b16 %v1115, %v1114
    %v1145 = vpack.c.b16 %v1117, %v1116
    %v1146 = vpack.c.b16 %v1119, %v1118
    %v1147 = vpack.c.b16 %v1121, %v1120
    %v1148 = vpack.c.b16 %v1123, %v1122
    %v1149 = vpack.c.b16 %v1125, %v1124
    %v1150 = vpack.c.b16 %v1127, %v1126
    %v1151 = vpack.c.b16 %v1129, %v1128
    %v1152 = vpack.c.b16 %v1131, %v1130
    %v1153 = vpack.c.b16 %v1133, %v1132
    %v1154 = vpack.c.b16 %v1135, %v1134
    %v1155 = vpack.c.b16 %v1137, %v1136
    %v1156 = vpack.c.b16 %v1139, %v1138
    %v1157 = vpack.c.b16 %v1141, %v1140
    %1174 = vmatpush.bf16.msra.mxu0 %v1149
    %1175 = vmatpush.bf16.msra.mxu0 %v1148
    %1176 = vmatpush.bf16.msra.mxu0 %v1147
    %1177 = vmatpush.bf16.msra.mxu0 %v1146
    %1178 = vmatpush.bf16.msra.mxu0 %v1145
    %1179 = vmatpush.bf16.msra.mxu0 %v1144
    %1180 = vmatpush.bf16.msra.mxu0 %v1143
    %1181 = vmatpush.bf16.msra.mxu0 %v1142
    %1182 = vmatmul.bf16.gmra.mxu0 %v1075
    %v1183 = vpop.f32.mrf.mxu0
    %v1184 = vadd.f32 %v1077, %v1183
    %v1185 = vpop.f32.mrf.mxu0
    %1186 = vdwg.mxu0
    %1187 = vmatpush.bf16.msra.mxu0 %v1157
    %1188 = vmatpush.bf16.msra.mxu0 %v1156
    %1189 = vmatpush.bf16.msra.mxu0 %v1155
    %1190 = vmatpush.bf16.msra.mxu0 %v1154
    %1191 = vmatpush.bf16.msra.mxu0 %v1153
    %1192 = vmatpush.bf16.msra.mxu0 %v1152
    %1193 = vmatpush.bf16.msra.mxu0 %v1151
    %1194 = vmatpush.bf16.msra.mxu0 %v1150
    %1195 = vmatmul.bf16.gmra.mxu0 %v1076
    %v1196 = vpop.f32.mrf.mxu0
    %v1197 = vadd.f32 %v1184, %v1196
    %v1198 = vpop.f32.mrf.mxu0
    %1199 = vdwg.mxu0
    %v1200 = vmul.f32 %v1197, 0.5
    %v1201 = vmul.f32 %v1197, 0.70710677
    %v1202 = vmul.f32 %v1201, %v1201
    %v1203 = vmin.f32 16.0, %v1202
    %v1204 = vmul.f32 %v1203, 2.1237322e-06
    %v1205 = vadd.f32 %v1204, 0.00028619796
    %v1206 = vmul.f32 %v1203, %v1205
    %v1207 = vadd.f32 %v1206, 0.0036580483
    %v1208 = vmul.f32 %v1203, %v1207
    %v1209 = vadd.f32 %v1208, 0.05243302
    %v1210 = vmul.f32 %v1203, %v1209
    %v1211 = vadd.f32 %v1210, 0.18741608
    %v1212 = vmul.f32 %v1203, %v1211
    %v1213 = vadd.f32 %v1212, 1.1283791
    %v1214 = vmul.f32 %v1201, %v1213
    %v1215 = vmul.f32 %v1203, 3.8918573e-05
    %v1216 = vadd.f32 %v1215, 0.001143296
    %v1217 = vmul.f32 %v1203, %v1216
    %v1218 = vadd.f32 %v1217, 0.014752088
    %v1219 = vmul.f32 %v1203, %v1218
    %v1220 = vadd.f32 %v1219, 0.112945676
    %v1221 = vmul.f32 %v1203, %v1220
    %v1222 = vadd.f32 %v1221, 0.4994258
    %v1223 = vmul.f32 %v1203, %v1222
    %v1224 = vadd.f32 %v1223, 1.0
    %v1225 = vrcp.pop %v1224
    %v1226 = vmul.f32 %v1224, %v1225
    %v1227 = vsub.f32 1.0, %v1226
    %v1228 = vmul.f32 %v1225, %v1227
    %v1229 = vadd.f32 %v1225, %v1228
    %vm1230 = vweird.f32 %v1224
    %vm1231 = vweird.f32 %v1225
    %vm1232 = vmor %vm1230, %vm1231
    %v1233 = vsel %vm1232, %v1225, %v1229
    %v1234 = vand.u32 2147483647, %v1224
    %vm1235 = vcmp.eq.f32.partialorder %v1234, 8.507059e+37
    %v1236 = vand.u32 %v1224, 2147483648
    %v1237 = vor.u32 1.1754944e-38, %v1236
    %v1238 = vsel %vm1235, %v1237, %v1233
    %v1239 = vmul.f32 %v1214, %v1238
    %v1240 = vmin.f32 %v1239, 1.0
    %v1241 = vmax.f32 %v1240, -1.0
    %v1242 = vadd.f32 %v1241, 1.0
    %v1243 = vmul.f32 %v1200, %v1242
    %v1244 = vpack.c.bf16 %v1243, %v1243
    %v1245 = vperm.slane %v139, 3
    %v1262 = vunpack.c.l.b16 %v1059
    %v1263 = vunpack.c.l.b16 %v1060
    %v1264 = vunpack.c.l.b16 %v1061
    %v1265 = vunpack.c.l.b16 %v1062
    %v1266 = vunpack.c.l.b16 %v1063
    %v1267 = vunpack.c.l.b16 %v1064
    %v1268 = vunpack.c.l.b16 %v1065
    %v1269 = vunpack.c.l.b16 %v1066
    %v1270 = vunpack.c.l.b16 %v1067
    %v1271 = vunpack.c.l.b16 %v1068
    %v1272 = vunpack.c.l.b16 %v1069
    %v1273 = vunpack.c.l.b16 %v1070
    %v1274 = vunpack.c.l.b16 %v1071
    %v1275 = vunpack.c.l.b16 %v1072
    %v1276 = vunpack.c.l.b16 %v1073
    %v1277 = vunpack.c.l.b16 %v1074
    %v1278 = vpack.c.b16 %v1263, %v1262
    %v1279 = vpack.c.b16 %v1265, %v1264
    %v1280 = vpack.c.b16 %v1267, %v1266
    %v1281 = vpack.c.b16 %v1269, %v1268
    %v1282 = vpack.c.b16 %v1271, %v1270
    %v1283 = vpack.c.b16 %v1273, %v1272
    %v1284 = vpack.c.b16 %v1275, %v1274
    %v1285 = vpack.c.b16 %v1277, %v1276
    %1294 = vmatpush.bf16.msra.mxu0 %v1285
    %1295 = vmatpush.bf16.msra.mxu0 %v1284
    %1296 = vmatpush.bf16.msra.mxu0 %v1283
    %1297 = vmatpush.bf16.msra.mxu0 %v1282
    %1298 = vmatpush.bf16.msra.mxu0 %v1281
    %1299 = vmatpush.bf16.msra.mxu0 %v1280
    %1300 = vmatpush.bf16.msra.mxu0 %v1279
    %1301 = vmatpush.bf16.msra.mxu0 %v1278
    %1302 = vmatmul.bf16.gmra.mxu0 %v1244
    %v1303 = vpop.f32.mrf.mxu0
    %v1304 = vadd.f32 %v1245, %v1303
    %v1305 = vpop.f32.mrf.mxu0
    %1306 = vdwg.mxu0
    %v1307 = vadd.f32 %v1304, %v1197
    %1308 = vadd.xlane.f32.xlu0 %v1307
    %v1309 = vpop.xlane.xlu0 %1308
    %v1310 = vmul.f32 %v1309, 0.0078125
    %v1311 = vsub.f32 %v1307, %v1310
    %v1312 = vmul.f32 %v1311, %v1311
    %1313 = vadd.xlane.f32.xlu0 %v1312
    %v1314 = vpop.xlane.xlu0 %1313
    %v1315 = vmul.f32 %v1314, 0.0078125
    %v1316 = vadd.f32 %v1315, 1e-05
    %v1317 = vrsqrt.pop %v1316
    %v1318 = vmul.f32 %v1317, %v1316
    %v1319 = vmul.f32 %v1318, %v1317
    %v1320 = vmul.f32 0.5, %v1319
    %v1321 = vsub.f32 1.5, %v1320
    %v1322 = vmul.f32 %v1317, %v1321
    %vm1323 = vweird.f32 %v1316
    %vm1324 = vweird.f32 %v1317
    %vm1325 = vmor %vm1323, %vm1324
    %v1326 = vsel %vm1325, %v1317, %v1322
    %v1327 = vmul.f32 %v1311, %v1326
    %v1328 = vperm.slane %v139, 4
    %v1329 = vmul.f32 %v1327, %v1328
    %v1330 = vperm.slane %v139, 5
    %v1331 = vadd.f32 %v1329, %v1330
    %1332 = vmatpush.xpose.msra.mxu0 0.0
    %1333 = vmatpush.xpose.msra.mxu0 0.0
    %1334 = vmatpush.xpose.msra.mxu0 0.0
    %1335 = vmatpush.xpose.msra.mxu0 0.0
    %1336 = vmatpush.xpose.msra.mxu0 0.0
    %1337 = vmatpush.xpose.msra.mxu0 0.0
    %1338 = vmatpush.xpose.msra.mxu0 0.0
    %1339 = vmatpush.xpose.msra.mxu0 0.0
    %1340 = vmatpush.xpose.msra.mxu0 0.0
    %1341 = vmatpush.xpose.msra.mxu0 0.0
    %1342 = vmatpush.xpose.msra.mxu0 0.0
    %1343 = vmatpush.xpose.msra.mxu0 0.0
    %1344 = vmatpush.xpose.msra.mxu0 0.0
    %1345 = vmatpush.xpose.msra.mxu0 0.0
    %1346 = vmatpush.xpose.msra.mxu0 0.0
    %1347 = vmatpush.xpose.msra.mxu0 %v1026
    %1348 = vmatmul.f32.gmra.mxu0 %v1331
    %v1349 = vpop.f32.mrf.mxu0
    %v1350 = vadd.f32 0.0, %v1349
    %1351 = vdwg.mxu0
    %1352 = vmatpush.xpose.msra.mxu0 0.0
    %1353 = vmatpush.xpose.msra.mxu0 0.0
    %1354 = vmatpush.xpose.msra.mxu0 0.0
    %1355 = vmatpush.xpose.msra.mxu0 0.0
    %1356 = vmatpush.xpose.msra.mxu0 0.0
    %1357 = vmatpush.xpose.msra.mxu0 0.0
    %1358 = vmatpush.xpose.msra.mxu0 0.0
    %1359 = vmatpush.xpose.msra.mxu0 0.0
    %1360 = vmatpush.xpose.msra.mxu0 0.0
    %1361 = vmatpush.xpose.msra.mxu0 0.0
    %1362 = vmatpush.xpose.msra.mxu0 0.0
    %1363 = vmatpush.xpose.msra.mxu0 0.0
    %1364 = vmatpush.xpose.msra.mxu0 0.0
    %1365 = vmatpush.xpose.msra.mxu0 0.0
    %1366 = vmatpush.xpose.msra.mxu0 0.0
    %1367 = vmatpush.xpose.msra.mxu0 %v1331
    %1368 = vmatmul.f32.gmra.mxu0 %v1331
    %v1369 = vpop.f32.mrf.mxu0
    %v1370 = vadd.f32 0.0, %v1369
    %1371 = vdwg.mxu0
    %1372 = vmatpush.xpose.msra.mxu0 0.0
    %1373 = vmatpush.xpose.msra.mxu0 0.0
    %1374 = vmatpush.xpose.msra.mxu0 0.0
    %1375 = vmatpush.xpose.msra.mxu0 0.0
    %1376 = vmatpush.xpose.msra.mxu0 0.0
    %1377 = vmatpush.xpose.msra.mxu0 0.0
    %1378 = vmatpush.xpose.msra.mxu0 0.0
    %1379 = vmatpush.xpose.msra.mxu0 0.0
    %1380 = vmatpush.xpose.msra.mxu0 0.0
    %1381 = vmatpush.xpose.msra.mxu0 0.0
    %1382 = vmatpush.xpose.msra.mxu0 0.0
    %1383 = vmatpush.xpose.msra.mxu0 0.0
    %1384 = vmatpush.xpose.msra.mxu0 0.0
    %1385 = vmatpush.xpose.msra.mxu0 0.0
    %1386 = vmatpush.xpose.msra.mxu0 0.0
    %1387 = vmatpush.xpose.msra.mxu0 %v1026
    %1388 = vmatmul.f32.gmra.mxu0 %v1026
    %v1389 = vpop.f32.mrf.mxu0
    %v1390 = vadd.f32 %v1370, %v1389
    %1391 = vdwg.mxu0
    %v1392 = vmul.f32 %v1390, 0.5
    %vm1393 = vcmask 64512
    %v1394 = vsel %vm1393, %v1392, -inf
    %1395 = vmax.xlane.f32.xlu0 %v1394
    %v1396 = vpop.xlane.xlu0 %1395
    %v1397 = vsub.f32 %v1392, %v1396
    %v1398 = vmul.f32 %v1397, 1.442695
    %v1399 = vpow.pop %v1398
    %v1400 = vsel %vm1393, %v1399, 0.0
    %1401 = vadd.xlane.f32.xlu0 %v1400
    %v1402 = vpop.xlane.xlu0 %1401
    %v1403 = vrcp.pop %v1402
    %v1404 = vmul.f32 %v1402, %v1403
    %v1405 = vsub.f32 1.0, %v1404
    %v1406 = vmul.f32 %v1403, %v1405
    %v1407 = vadd.f32 %v1403, %v1406
    %vm1408 = vweird.f32 %v1402
    %vm1409 = vweird.f32 %v1403
    %vm1410 = vmor %vm1408, %vm1409
    %v1411 = vsel %vm1410, %v1403, %v1407
    %v1412 = vand.u32 2147483647, %v1402
    %vm1413 = vcmp.eq.f32.partialorder %v1412, 8.507059e+37
    %v1414 = vand.u32 %v1402, 2147483648
    %v1415 = vor.u32 1.1754944e-38, %v1414
    %v1416 = vsel %vm1413, %v1415, %v1411
    %v1417 = vmul.f32 %v1399, %v1416
    %v1418 = vsel %vm1393, %v1350, -inf
    %1419 = vmax.xlane.f32.xlu0 %v1418
    %v1420 = vpop.xlane.xlu0 %1419
    %v1421 = vsub.f32 %v1350, %v1420
    %v1422 = vmul.f32 %v1421, 1.442695
    %v1423 = vpow.pop %v1422
    %v1424 = vsel %vm1393, %v1423, 0.0
    %1425 = vadd.xlane.f32.xlu0 %v1424
    %v1426 = vpop.xlane.xlu0 %1425
    %v1427 = vlog2.pop %v1426
    %v1428 = vmul.f32 %v1427, 0.6931472
    %v1429 = vsub.f32 %v1421, %v1428
    %v1430 = vrot.slane %v1418, 4
    %v1431 = vmax.f32 %v1418, %v1430
    %v1432 = vrot.slane %v1431, 2
    %v1433 = vmax.f32 %v1431, %v1432
    %v1434 = vrot.slane %v1433, 1
    %v1435 = vmax.f32 %v1433, %v1434
    %v1436 = vsub.f32 %v1350, %v1435
    %v1437 = vmul.f32 %v1436, 1.442695
    %v1438 = vpow.pop %v1437
    %v1439 = vsel %vm1393, %v1438, 0.0
    %v1440 = vrot.slane %v1439, 4
    %v1441 = vadd.f32 %v1439, %v1440
    %v1442 = vrot.slane %v1441, 2
    %v1443 = vadd.f32 %v1441, %v1442
    %v1444 = vrot.slane %v1443, 1
    %v1445 = vadd.f32 %v1443, %v1444
    %v1446 = vlog2.pop %v1445
    %v1447 = vmul.f32 %v1446, 0.6931472
    %v1448 = vsub.f32 %v1436, %v1447
    %v1449 = vsub.f32 0.0, %v1417
    %v1450 = vmul.f32 %v1449, %v1429
    %v1451 = vsel %vm1393, %v1450, 0.0
    %1452 = vadd.xlane.f32.xlu0 %v1451
    %v1453 = vpop.xlane.xlu0 %1452
    %v1454 = vrot.slane %v1453, 4
    %v1455 = vadd.f32 %v1453, %v1454
    %v1456 = vrot.slane %v1455, 2
    %v1457 = vadd.f32 %v1455, %v1456
    %v1458 = vrot.slane %v1457, 1
    %v1459 = vadd.f32 %v1457, %v1458
    %s1460 = vtos %v1459
    %v1461 = vmul.f32 %v1449, %v1448
    %v1462 = vsel %vm1393, %v1461, 0.0
    %1463 = vadd.xlane.f32.xlu0 %v1462
    %v1464 = vpop.xlane.xlu0 %1463
    %v1465 = vrot.slane %v1464, 4
    %v1466 = vadd.f32 %v1464, %v1465
    %v1467 = vrot.slane %v1466, 2
    %v1468 = vadd.f32 %v1466, %v1467
    %v1469 = vrot.slane %v1468, 1
    %v1470 = vadd.f32 %v1468, %v1469
    %s1471 = vtos %v1470
    %s1472 = sadd.f32 %s1460, %s1471
    %s1473 = smul.f32 %s1472, 0.0625
    %s1474 = scalar_lea.smem [#allocation14], 0
    %1475 = sst [smem:[%s1474]] %s1473
    // Predicated region
    $region62: #{model_forward.1} parent=1 // pred_check
      _
    $region63: #{model_forward.1} parent=1 // pred_check_branch
      %1477 = sbr.rel (0) target = $region65
    $region64: #{model_forward.1} parent=1 // pred_region
      %1479 = vsyncadd [#allocation8], 0
      %s1481 = sshll.u32 %s11, 4
      %s1482 = int_to_ptr.hbm [resolvable:$true] %s1481
      %1484 = dma.smem_to_hbm [#allocation14], 16, %s1482, [#allocation8]
    $region65: #{model_forward.1} parent=1 // pred_fallthru
      _
    // Predicated region
    $region66: #{model_forward.1} parent=1 // pred_check
      _
    $region67: #{model_forward.1} parent=1 // pred_check_branch
      %1486 = sbr.rel (0) target = $region69
    $region68: #{model_forward.1} parent=1 // pred_region
      %1488 = dma.done [#allocation8], 16
    $region69: #{model_forward.1} parent=1 // pred_fallthru
      _
    %1489 = sfence
    %1490 = vsyncpa [#allocation7], 1
    %1491 = vsyncpa [#allocation10], 1
    %1492 = vsyncpa [#allocation13], 1
    %1493 = vsyncpa [#allocation8], 1
  %1494 = vsyncmov [#allocation5]
  %s1495 = vpop.sfrf %1494
  %p1496 = scmp.eq.s32.totalorder %s1495, 0
  %p1497 = pneg %p1496
  %1499 = shalt.err (%p1497)
  %s1500 = scalar_lea.sflag [#allocation5], 1
  %1501 = vsyncmov %s1500
  %s1502 = vpop.sfrf %1501
  %p1503 = scmp.eq.s32.totalorder %s1502, 0
  %p1504 = pneg %p1503
  %1506 = shalt.err (%p1504)
  %s1507 = scalar_lea.sflag [#allocation5], 2
  %1508 = vsyncmov %s1507
  %s1509 = vpop.sfrf %1508
  %p1510 = scmp.eq.s32.totalorder %s1509, 0
  %p1511 = pneg %p1510
  %1513 = shalt.err (%p1511)

</llo_original>
